<compile_context>
chip_gen: v6e
topology: v6e:2x2x1
jax: 0.10.0
libtpu: 0.0.40
codegen_flags: <defaults>
</compile_context>

<pallas_src>
import functools

import jax
import jax.numpy as jnp
from jax import lax
from jax.experimental import pallas as pl
from jax.experimental.pallas import tpu as pltpu

EPS = 1e-5
_MAX_PAD = 2     # largest Conv1d padding inside an Inception block (k=5 branch)


# ---------------------------------------------------------------------------
# fused forward kernel
# ---------------------------------------------------------------------------
def _textcnn_kernel(tok_ref, emb_ref,
                    wa1_ref, wb1_ref, wa2_ref, wb2_ref,
                    fw1_ref, fw2_ref, pvec_ref,
                    o_ref, x_buf, mask_buf,
                    *, B, L, S, c4, hidden, nc):
    rows = B * S
    co = 4 * c4
    inv_n = 1.0 / float(B * L)          # BN population = valid (non-halo) rows

    def pv(row, w):                     # (1, w) slice of the packed param table
        return pvec_ref[row:row + 1, :w]

    # --- embedding lookup: real gather, O(rows*D) ----------------------------
    # Halo rows (Conv1d zero padding) stay exactly zero; valid rows are filled
    # from the table using the scalar-prefetched token ids (SMEM).
    x_buf[...] = jnp.zeros_like(x_buf)
    mask_buf[...] = jnp.zeros_like(mask_buf)

    def gather_batch(b, acc):
        base = b * S + _MAX_PAD
        mask_buf[pl.ds(base, L), :] = jnp.ones((L, 1), jnp.float32)

        def gather_row(i, a):
            x_buf[pl.ds(base + i, 1), :] = emb_ref[pl.ds(tok_ref[b * L + i], 1), :]
            return a

        return lax.fori_loop(0, L, gather_row, acc)

    lax.fori_loop(0, B, gather_batch, 0)

    row_mask = mask_buf[...]            # (rows, 1): 1.0 on valid rows, else 0.0
    x = x_buf[...]                      # (rows, D) f32, zero halo rows

    cid = lax.broadcasted_iota(jnp.int32, (1, co), 1)
    keep_outer = jnp.where(jnp.logical_or(cid < c4, cid >= 3 * c4), 1.0, 0.0)

    def shift(v, s):
        # shifted[r] = v[r - s]; circular wrap always lands on zero halo rows
        # because each batch owns >= _MAX_PAD halo rows on each side.
        s = s % rows
        return v if s == 0 else pltpu.roll(v, s, 0)

    def bn_relu(v, gamma, beta):
        # training-mode BatchNorm1d over valid rows.  Both reductions fused in
        # one lane-concat sum; one-pass E[x^2]-mean^2 clamped at 0 (same form
        # as the fc BN below -> consistent numerics).
        c = v.shape[1]
        vm = v * row_mask
        stats = jnp.sum(jnp.concatenate([vm, vm * vm], axis=-1),
                        axis=0, keepdims=True) * inv_n
        mean, ex2 = stats[:, :c], stats[:, c:]
        inv_std = lax.rsqrt(jnp.maximum(ex2 - mean * mean, 0.0) + EPS)
        return jnp.maximum((vm - mean) * inv_std * gamma + beta, 0.0)

    def conv_taps(v, w_ref, bias, pad):
        # Conv1d(padding=pad) as K per-tap MXU matmuls accumulated in f32
        # (no im2col lane-concat buffer; bf16 inputs, f32 accumulation).
        K = w_ref.shape[0]
        acc = jnp.zeros((rows, w_ref.shape[2]), jnp.float32) + bias
        for k in range(K):
            acc = acc + jnp.dot(shift(v, pad - k).astype(jnp.bfloat16), w_ref[k],
                                preferred_element_type=jnp.float32)
        return acc

    def inception(v, wa_ref, wb_ref, prow):
        ba, gm, bm = pv(prow, co), pv(prow + 1, 2 * c4), pv(prow + 2, 2 * c4)
        bb, gf, bf = pv(prow + 3, co), pv(prow + 4, co), pv(prow + 5, co)
        # stage 1: [branch1 | branch2-mid | branch3-mid | branch4] in one K=3 frame
        s1 = conv_taps(v, wa_ref, ba, 1)
        # middle branches: BN -> ReLU, halos re-zeroed before the next conv
        t = bn_relu(s1[:, c4:3 * c4], gm, bm) * row_mask
        # stage 2: branch2 (k=3) and branch3 (k=5) in one K=5 frame, columns pre-placed
        br23 = conv_taps(t, wb_ref, bb, 2)
        cat = s1 * keep_outer + br23                # == torch.cat(branches, dim=1)
        # activa: BatchNorm1d(co) -> ReLU; re-zero halos for the next consumer
        return bn_relu(cat, gf, bf) * row_mask

    x = inception(x, wa1_ref, wb1_ref, 0)
    x = inception(x, wa2_ref, wb2_ref, 6)

    # --- MaxPool1d(L): 8-aligned per-batch stride -> one reshape + one max ----
    # post-ReLU values are >= 0 and halo rows are 0, so the max over the full
    # stride equals the max over the L valid positions.
    pooled = jnp.max(x.reshape(B, S, co), axis=1)            # (B, co)

    # --- fc head: Linear -> BatchNorm1d -> ReLU -> Linear ----------------------
    h = jnp.dot(pooled.astype(jnp.bfloat16), fw1_ref[...],
                preferred_element_type=jnp.float32) + pv(12, hidden)
    mean = jnp.mean(h, axis=0, keepdims=True)
    ex2 = jnp.mean(h * h, axis=0, keepdims=True)
    inv_std = lax.rsqrt(jnp.maximum(ex2 - mean * mean, 0.0) + EPS)
    h = jnp.maximum((h - mean) * inv_std * pv(13, hidden) + pv(14, hidden), 0.0)
    o_ref[...] = jnp.dot(h.astype(jnp.bfloat16), fw2_ref[...],
                         preferred_element_type=jnp.float32) + pv(15, nc)


# ---------------------------------------------------------------------------
# host-side weight packing + wrapper
# ---------------------------------------------------------------------------
def pack_inception(p, cin, c4):
    """Conv weights kept as (K, Cin, Cout) slabs; branches pre-placed in columns."""
    co = 4 * c4
    # stage-1: common K=3 frame; columns [br1 | br2-mid | br3-mid | br4]
    wa = jnp.zeros((3, cin, co), jnp.float32)
    wa = wa.at[1, :, 0 * c4:1 * c4].set(p["w1"][0])      # branch1 conv k=1 (center tap)
    wa = wa.at[1, :, 1 * c4:2 * c4].set(p["w2a"][0])     # branch2.conv1 k=1
    wa = wa.at[:, :, 2 * c4:3 * c4].set(p["w3a"])        # branch3.conv1 k=3, pad=1
    wa = wa.at[:, :, 3 * c4:4 * c4].set(p["w4"])         # branch4 conv k=3, pad=1
    ba = jnp.concatenate([p["b1"], p["b2a"], p["b3a"], p["b4"]], axis=-1)
    # stage-2: common K=5 frame; output pre-placed at columns [c4:3*c4]
    wb = jnp.zeros((5, 2 * c4, co), jnp.float32)
    wb = wb.at[1:4, 0:c4, 1 * c4:2 * c4].set(p["w2b"])        # k=3 conv in K=5 frame
    wb = wb.at[:, c4:2 * c4, 2 * c4:3 * c4].set(p["w3b"])     # k=5 conv
    zb = jnp.zeros((1, c4), jnp.float32)
    bb = jnp.concatenate([zb, p["b2b"], p["b3b"], zb], axis=-1)
    return dict(
        wa=wa.astype(jnp.bfloat16), ba=ba,
        gm=jnp.concatenate([p["g2"], p["g3"]], axis=-1),
        bm=jnp.concatenate([p["be2"], p["be3"]], axis=-1),
        wb=wb.astype(jnp.bfloat16), bb=bb,
        gf=p["gf"], bf=p["bef"])


def pack_params(p1, p2, fc, width):
    """Pack all tiny (1, c) vectors into one lane-padded (16, width) f32 operand."""
    def row(v):
        v = jnp.asarray(v, jnp.float32).reshape(1, -1)
        return jnp.pad(v, ((0, 0), (0, width - v.shape[1])))
    rows = []
    for p in (p1, p2):
        rows += [row(p[k]) for k in ("ba", "gm", "bm", "bb", "gf", "bf")]
    rows += [row(fc[k]) for k in ("b1", "g", "be", "b2")]
    return jnp.concatenate(rows, axis=0)


def _fullspec(a):
    nd = a.ndim
    return pl.BlockSpec(a.shape, lambda i, tok, _nd=nd: (0,) * _nd)


def textcnn_forward(tokens, emb, p1, p2, fc, *, c4):
    B, L = tokens.shape
    V, D = emb.shape
    co = 4 * c4
    hidden = fc["w1"].shape[1]
    nc = fc["w2"].shape[1]
    # per-batch row stride: front halo + L valid rows + back halo, rounded to a
    # multiple of 8 so every per-batch block is sublane-aligned.
    S = -(-(L + 2 * _MAX_PAD) // 8) * 8
    assert S - (_MAX_PAD + L) >= _MAX_PAD, "halo must cover the widest conv pad"

    width = max(co, 2 * c4, hidden, nc)
    pvec = pack_params(p1, p2, fc, width)
    tok_flat = tokens.reshape(B * L).astype(jnp.int32)
    weights = [emb.astype(jnp.float32),
               p1["wa"], p1["wb"], p2["wa"], p2["wb"],
               fc["w1"].astype(jnp.bfloat16), fc["w2"].astype(jnp.bfloat16),
               pvec]

    kernel = functools.partial(_textcnn_kernel, B=B, L=L, S=S, c4=c4,
                               hidden=hidden, nc=nc)
    return pl.pallas_call(
        kernel,
        out_shape=jax.ShapeDtypeStruct((B, nc), jnp.float32),
        grid_spec=pltpu.PrefetchScalarGridSpec(
            num_scalar_prefetch=1,           # token ids -> SMEM
            grid=(1,),
            in_specs=[_fullspec(a) for a in weights],
            out_specs=pl.BlockSpec((B, nc), lambda i, tok: (0, 0)),
            scratch_shapes=[pltpu.VMEM((B * S, D), jnp.float32),   # gathered emb
                            pltpu.VMEM((B * S, 1), jnp.float32)]), # valid-row mask
        compiler_params=pltpu.CompilerParams(
            dimension_semantics=("arbitrary",),
            vmem_limit_bytes=32 << 20),   # safe on v5e (16M default) / v6e / v7x (64M)
    )(tok_flat, *weights)


# ---------------------------------------------------------------------------
# parameter init + demo
# ---------------------------------------------------------------------------
def _init(key, shape, scale=0.1):
    return scale * jax.random.normal(key, shape, jnp.float32)


if __name__ == "__main__":
    vocab_size, embedding_dim = 100, 16
    incept_dim, max_seq_len = 32, 16          # incept_dim % 4 == 0
    linear_hidden_size, num_classes = 32, 4
    B = 2
    c4 = incept_dim // 4

    keys = jax.random.split(jax.random.PRNGKey(0), 64)
    _it = iter(range(64))
    nk = lambda: keys[next(_it)]

    emb = _init(nk(), (vocab_size, embedding_dim), 1.0)

    def incept_params(cin):
        return dict(
            w1=_init(nk(), (1, cin, c4)), b1=_init(nk(), (1, c4)),
            w2a=_init(nk(), (1, cin, c4)), b2a=_init(nk(), (1, c4)),
            g2=1.0 + _init(nk(), (1, c4)), be2=_init(nk(), (1, c4)),
            w2b=_init(nk(), (3, c4, c4)), b2b=_init(nk(), (1, c4)),
            w3a=_init(nk(), (3, cin, c4)), b3a=_init(nk(), (1, c4)),
            g3=1.0 + _init(nk(), (1, c4)), be3=_init(nk(), (1, c4)),
            w3b=_init(nk(), (5, c4, c4)), b3b=_init(nk(), (1, c4)),
            w4=_init(nk(), (3, cin, c4)), b4=_init(nk(), (1, c4)),
            gf=1.0 + _init(nk(), (1, 4 * c4)), bef=_init(nk(), (1, 4 * c4)),
        )

    p1 = pack_inception(incept_params(embedding_dim), embedding_dim, c4)
    p2 = pack_inception(incept_params(incept_dim), incept_dim, c4)
    fcp = dict(
        w1=_init(nk(), (incept_dim, linear_hidden_size)),
        b1=_init(nk(), (1, linear_hidden_size)),
        g=1.0 + _init(nk(), (1, linear_hidden_size)),
        be=_init(nk(), (1, linear_hidden_size)),
        w2=_init(nk(), (linear_hidden_size, num_classes)),
        b2=_init(nk(), (1, num_classes)),
    )

    tokens = jax.random.randint(nk(), (B, max_seq_len), 0, vocab_size)

    fwd = jax.jit(functools.partial(textcnn_forward, c4=c4))
    out = fwd(tokens, emb, p1, p2, fcp)
    out = jax.block_until_ready(out)
    assert out.shape == (B, num_classes) and out.dtype == jnp.float32
    print("KERNEL_OK")
</pallas_src>

<mosaic_0001>
module attributes {stable_mosaic.version = 11 : i64} {
  func.func @_textcnn_kernel(%arg0: i32, %arg1: memref<32xi32, #tpu.memory_space<smem>>, %arg2: memref<100x16xf32, #tpu.memory_space<vmem>>, %arg3: memref<3x16x32xbf16, #tpu.memory_space<vmem>>, %arg4: memref<5x16x32xbf16, #tpu.memory_space<vmem>>, %arg5: memref<3x32x32xbf16, #tpu.memory_space<vmem>>, %arg6: memref<5x16x32xbf16, #tpu.memory_space<vmem>>, %arg7: memref<32x32xbf16, #tpu.memory_space<vmem>>, %arg8: memref<32x4xbf16, #tpu.memory_space<vmem>>, %arg9: memref<16x32xf32, #tpu.memory_space<vmem>>, %arg10: memref<2x4xf32, #tpu.memory_space<vmem>>, %arg11: memref<48x16xf32, #tpu.memory_space<vmem>>, %arg12: memref<48x1xf32, #tpu.memory_space<vmem>>) attributes {dimension_semantics = [#tpu.dimension_semantics<arbitrary>], iteration_bounds = array<i64: 1>, scalar_prefetch = 1 : i64, scratch_operands = 2 : i64, tpu.core_type = #tpu.core_type<tc>, window_params = [{pipeline_mode = #tpu.pipeline_mode<synchronous>, transform_indices = @transform_0, window_bounds = array<i64: 100, 16>}, {pipeline_mode = #tpu.pipeline_mode<synchronous>, transform_indices = @transform_1, window_bounds = array<i64: 3, 16, 32>}, {pipeline_mode = #tpu.pipeline_mode<synchronous>, transform_indices = @transform_2, window_bounds = array<i64: 5, 16, 32>}, {pipeline_mode = #tpu.pipeline_mode<synchronous>, transform_indices = @transform_3, window_bounds = array<i64: 3, 32, 32>}, {pipeline_mode = #tpu.pipeline_mode<synchronous>, transform_indices = @transform_4, window_bounds = array<i64: 5, 16, 32>}, {pipeline_mode = #tpu.pipeline_mode<synchronous>, transform_indices = @transform_5, window_bounds = array<i64: 32, 32>}, {pipeline_mode = #tpu.pipeline_mode<synchronous>, transform_indices = @transform_6, window_bounds = array<i64: 32, 4>}, {pipeline_mode = #tpu.pipeline_mode<synchronous>, transform_indices = @transform_7, window_bounds = array<i64: 16, 32>}, {pipeline_mode = #tpu.pipeline_mode<synchronous>, transform_indices = @transform_8, window_bounds = array<i64: 2, 4>}]} {
    %cst = arith.constant 0.000000e+00 : f32
    %0 = vector.broadcast %cst : f32 to vector<48x16xf32>
    %c0 = arith.constant 0 : index
    %c0_0 = arith.constant 0 : index
    %1 = vector.load %arg11[%c0, %c0_0] : memref<48x16xf32, #tpu.memory_space<vmem>>, vector<48x16xf32>
    tpu.vector_store %arg11[%c0, %c0_0], %0 {strides = array<i32>} : memref<48x16xf32, #tpu.memory_space<vmem>>, vector<48x16xf32>,
    %cst_1 = arith.constant 0.000000e+00 : f32
    %2 = vector.broadcast %cst_1 : f32 to vector<48x1xf32>
    %c0_2 = arith.constant 0 : index
    %c0_3 = arith.constant 0 : index
    %3 = vector.load %arg12[%c0_2, %c0_3] : memref<48x1xf32, #tpu.memory_space<vmem>>, vector<48x1xf32>
    tpu.vector_store %arg12[%c0_2, %c0_3], %2 {strides = array<i32>} : memref<48x1xf32, #tpu.memory_space<vmem>>, vector<48x1xf32>,
    %c0_i32 = arith.constant 0 : i32
    %c2_i32 = arith.constant 2 : i32
    %4 = arith.addi %c0_i32, %c2_i32 : i32
    %c1_i32 = arith.constant 1 : i32
    scf.for %arg13 = %c0_i32 to %4 step %c1_i32  : i32 {
      %c24_i32_142 = arith.constant 24 : i32
      %299 = arith.muli %arg13, %c24_i32_142 : i32
      %c2_i32_143 = arith.constant 2 : i32
      %300 = arith.addi %299, %c2_i32_143 : i32
      %cst_144 = arith.constant 1.000000e+00 : f32
      %301 = vector.broadcast %cst_144 : f32 to vector<16x1xf32>
      %302 = arith.index_cast %300 : i32 to index
      %c0_145 = arith.constant 0 : index
      %303 = vector.load %arg12[%302, %c0_145] : memref<48x1xf32, #tpu.memory_space<vmem>>, vector<16x1xf32>
      tpu.vector_store %arg12[%302, %c0_145], %301 {strides = array<i32>} : memref<48x1xf32, #tpu.memory_space<vmem>>, vector<16x1xf32>,
      %c0_i32_146 = arith.constant 0 : i32
      %c16_i32 = arith.constant 16 : i32
      %304 = arith.addi %c0_i32_146, %c16_i32 : i32
      %c1_i32_147 = arith.constant 1 : i32
      scf.for %arg14 = %c0_i32_146 to %304 step %c1_i32_147  : i32 {
        %c16_i32_149 = arith.constant 16 : i32
        %305 = arith.muli %arg13, %c16_i32_149 : i32
        %306 = arith.addi %305, %arg14 : i32
        %307 = arith.index_cast %306 : i32 to index
        %308 = memref.load %arg1[%307] : memref<32xi32, #tpu.memory_space<smem>>
        %309 = arith.index_cast %308 : i32 to index
        %c0_150 = arith.constant 0 : index
        %310 = vector.load %arg2[%309, %c0_150] : memref<100x16xf32, #tpu.memory_space<vmem>>, vector<1x16xf32>
        %311 = arith.addi %300, %arg14 : i32
        %312 = arith.index_cast %311 : i32 to index
        %c0_151 = arith.constant 0 : index
        %313 = vector.load %arg11[%312, %c0_151] : memref<48x16xf32, #tpu.memory_space<vmem>>, vector<1x16xf32>
        tpu.vector_store %arg11[%312, %c0_151], %310 {strides = array<i32>} : memref<48x16xf32, #tpu.memory_space<vmem>>, vector<1x16xf32>,
      }
      %c16_i32_148 = arith.constant 16 : i32
    }
    %c2_i32_4 = arith.constant 2 : i32
    %c0_5 = arith.constant 0 : index
    %c0_6 = arith.constant 0 : index
    %5 = vector.load %arg12[%c0_5, %c0_6] : memref<48x1xf32, #tpu.memory_space<vmem>>, vector<48x1xf32>
    %c0_7 = arith.constant 0 : index
    %c0_8 = arith.constant 0 : index
    %6 = vector.load %arg11[%c0_7, %c0_8] : memref<48x16xf32, #tpu.memory_space<vmem>>, vector<48x16xf32>
    %7 = tpu.iota {dimensions = array<i32: 1>} : vector<1x32xi32>
    %c8_i32 = arith.constant 8 : i32
    %8 = vector.broadcast %c8_i32 : i32 to vector<1x32xi32>
    %9 = arith.cmpi slt, %7, %8 : vector<1x32xi32>
    %c24_i32 = arith.constant 24 : i32
    %10 = vector.broadcast %c24_i32 : i32 to vector<1x32xi32>
    %11 = arith.cmpi sge, %7, %10 : vector<1x32xi32>
    %12 = arith.ori %9, %11 : vector<1x32xi1>
    %cst_9 = arith.constant 1.000000e+00 : f32
    %cst_10 = arith.constant 0.000000e+00 : f32
    %13 = vector.broadcast %cst_9 : f32 to vector<1x32xf32>
    %14 = vector.broadcast %cst_10 : f32 to vector<1x32xf32>
    %15 = arith.select %12, %13, %14 : vector<1x32xi1>, vector<1x32xf32>
    %c0_11 = arith.constant 0 : index
    %c0_12 = arith.constant 0 : index
    %16 = vector.load %arg9[%c0_11, %c0_12] : memref<16x32xf32, #tpu.memory_space<vmem>>, vector<1x32xf32>
    %c1 = arith.constant 1 : index
    %c0_13 = arith.constant 0 : index
    %17 = vector.load %arg9[%c1, %c0_13] : memref<16x32xf32, #tpu.memory_space<vmem>>, vector<1x16xf32>
    %c2 = arith.constant 2 : index
    %c0_14 = arith.constant 0 : index
    %18 = vector.load %arg9[%c2, %c0_14] : memref<16x32xf32, #tpu.memory_space<vmem>>, vector<1x16xf32>
    %c3 = arith.constant 3 : index
    %c0_15 = arith.constant 0 : index
    %19 = vector.load %arg9[%c3, %c0_15] : memref<16x32xf32, #tpu.memory_space<vmem>>, vector<1x32xf32>
    %c4 = arith.constant 4 : index
    %c0_16 = arith.constant 0 : index
    %20 = vector.load %arg9[%c4, %c0_16] : memref<16x32xf32, #tpu.memory_space<vmem>>, vector<1x32xf32>
    %c5 = arith.constant 5 : index
    %c0_17 = arith.constant 0 : index
    %21 = vector.load %arg9[%c5, %c0_17] : memref<16x32xf32, #tpu.memory_space<vmem>>, vector<1x32xf32>
    %cst_18 = arith.constant 0.000000e+00 : f32
    %22 = vector.broadcast %cst_18 : f32 to vector<48x32xf32>
    %23 = vector.broadcast %16 : vector<1x32xf32> to vector<48x32xf32>
    %24 = arith.addf %22, %23 : vector<48x32xf32>
    %c1_i32_19 = arith.constant 1 : i32
    %25 = tpu.dynamic_rotate %6 by %c1_i32_19 dim 0 : vector<48x16xf32>, i32 -> vector<48x16xf32>
    %26 = arith.truncf %25 : vector<48x16xf32> to vector<48x16xbf16>
    %c0_20 = arith.constant 0 : index
    %c0_21 = arith.constant 0 : index
    %c0_22 = arith.constant 0 : index
    %27 = vector.load %arg3[%c0_20, %c0_21, %c0_22] : memref<3x16x32xbf16, #tpu.memory_space<vmem>>, vector<1x16x32xbf16>
    %28 = vector.shape_cast %27 : vector<1x16x32xbf16> to vector<16x32xbf16>
    %cst_23 = arith.constant dense<0.000000e+00> : vector<48x32xf32>
    %29 = tpu.matmul %26, %28, %cst_23 {dimension_numbers = #tpu.dot_dimension_numbers<[1], [0], [0], [1], [0, 0, 1, 1], [], []>} : vector<48x16xbf16>, vector<16x32xbf16>, vector<48x32xf32> -> vector<48x32xf32>
    %30 = arith.addf %24, %29 : vector<48x32xf32>
    %31 = arith.truncf %6 : vector<48x16xf32> to vector<48x16xbf16>
    %c1_24 = arith.constant 1 : index
    %c0_25 = arith.constant 0 : index
    %c0_26 = arith.constant 0 : index
    %32 = vector.load %arg3[%c1_24, %c0_25, %c0_26] : memref<3x16x32xbf16, #tpu.memory_space<vmem>>, vector<1x16x32xbf16>
    %33 = vector.shape_cast %32 : vector<1x16x32xbf16> to vector<16x32xbf16>
    %cst_27 = arith.constant dense<0.000000e+00> : vector<48x32xf32>
    %34 = tpu.matmul %31, %33, %cst_27 {dimension_numbers = #tpu.dot_dimension_numbers<[1], [0], [0], [1], [0, 0, 1, 1], [], []>} : vector<48x16xbf16>, vector<16x32xbf16>, vector<48x32xf32> -> vector<48x32xf32>
    %35 = arith.addf %30, %34 : vector<48x32xf32>
    %c47_i32 = arith.constant 47 : i32
    %36 = tpu.dynamic_rotate %6 by %c47_i32 dim 0 : vector<48x16xf32>, i32 -> vector<48x16xf32>
    %37 = arith.truncf %36 : vector<48x16xf32> to vector<48x16xbf16>
    %c2_28 = arith.constant 2 : index
    %c0_29 = arith.constant 0 : index
    %c0_30 = arith.constant 0 : index
    %38 = vector.load %arg3[%c2_28, %c0_29, %c0_30] : memref<3x16x32xbf16, #tpu.memory_space<vmem>>, vector<1x16x32xbf16>
    %39 = vector.shape_cast %38 : vector<1x16x32xbf16> to vector<16x32xbf16>
    %cst_31 = arith.constant dense<0.000000e+00> : vector<48x32xf32>
    %40 = tpu.matmul %37, %39, %cst_31 {dimension_numbers = #tpu.dot_dimension_numbers<[1], [0], [0], [1], [0, 0, 1, 1], [], []>} : vector<48x16xbf16>, vector<16x32xbf16>, vector<48x32xf32> -> vector<48x32xf32>
    %41 = arith.addf %35, %40 : vector<48x32xf32>
    %42 = vector.extract_strided_slice %41 {offsets = [0, 8], sizes = [48, 16], strides = [1, 1]} : vector<48x32xf32> to vector<48x16xf32>
    %43 = vector.broadcast %5 : vector<48x1xf32> to vector<48x16xf32>
    %44 = arith.mulf %42, %43 : vector<48x16xf32>
    %45 = arith.mulf %44, %44 : vector<48x16xf32>
    %46 = tpu.concatenate %44, %45 in 1 : vector<48x16xf32>, vector<48x16xf32> -> vector<48x32xf32>
    %cst_32 = arith.constant dense<0.000000e+00> : vector<32xf32>
    %47 = vector.multi_reduction <add>, %46, %cst_32 [0] : vector<48x32xf32> to vector<32xf32>
    %48 = vector.shape_cast %47 : vector<32xf32> to vector<1x32xf32>
    %cst_33 = arith.constant 3.125000e-02 : f32
    %49 = vector.broadcast %cst_33 : f32 to vector<1x32xf32>
    %50 = arith.mulf %48, %49 : vector<1x32xf32>
    %51 = vector.extract_strided_slice %50 {offsets = [0, 0], sizes = [1, 16], strides = [1, 1]} : vector<1x32xf32> to vector<1x16xf32>
    %52 = vector.extract_strided_slice %50 {offsets = [0, 16], sizes = [1, 16], strides = [1, 1]} : vector<1x32xf32> to vector<1x16xf32>
    %53 = arith.mulf %51, %51 : vector<1x16xf32>
    %54 = arith.subf %52, %53 : vector<1x16xf32>
    %cst_34 = arith.constant 0.000000e+00 : f32
    %55 = vector.broadcast %cst_34 : f32 to vector<1x16xf32>
    %56 = arith.maximumf %54, %55 : vector<1x16xf32>
    %cst_35 = arith.constant 9.99999974E-6 : f32
    %57 = vector.broadcast %cst_35 : f32 to vector<1x16xf32>
    %58 = arith.addf %56, %57 : vector<1x16xf32>
    %59 = math.rsqrt %58 : vector<1x16xf32>
    %60 = vector.broadcast %51 : vector<1x16xf32> to vector<48x16xf32>
    %61 = arith.subf %44, %60 : vector<48x16xf32>
    %62 = vector.broadcast %59 : vector<1x16xf32> to vector<48x16xf32>
    %63 = arith.mulf %61, %62 : vector<48x16xf32>
    %64 = vector.broadcast %17 : vector<1x16xf32> to vector<48x16xf32>
    %65 = arith.mulf %63, %64 : vector<48x16xf32>
    %66 = vector.broadcast %18 : vector<1x16xf32> to vector<48x16xf32>
    %67 = arith.addf %65, %66 : vector<48x16xf32>
    %cst_36 = arith.constant 0.000000e+00 : f32
    %68 = vector.broadcast %cst_36 : f32 to vector<48x16xf32>
    %69 = arith.maximumf %67, %68 : vector<48x16xf32>
    %70 = vector.broadcast %5 : vector<48x1xf32> to vector<48x16xf32>
    %71 = arith.mulf %69, %70 : vector<48x16xf32>
    %cst_37 = arith.constant 0.000000e+00 : f32
    %72 = vector.broadcast %cst_37 : f32 to vector<48x32xf32>
    %73 = vector.broadcast %19 : vector<1x32xf32> to vector<48x32xf32>
    %74 = arith.addf %72, %73 : vector<48x32xf32>
    %c2_i32_38 = arith.constant 2 : i32
    %75 = tpu.dynamic_rotate %71 by %c2_i32_38 dim 0 : vector<48x16xf32>, i32 -> vector<48x16xf32>
    %76 = arith.truncf %75 : vector<48x16xf32> to vector<48x16xbf16>
    %c0_39 = arith.constant 0 : index
    %c0_40 = arith.constant 0 : index
    %c0_41 = arith.constant 0 : index
    %77 = vector.load %arg4[%c0_39, %c0_40, %c0_41] : memref<5x16x32xbf16, #tpu.memory_space<vmem>>, vector<1x16x32xbf16>
    %78 = vector.shape_cast %77 : vector<1x16x32xbf16> to vector<16x32xbf16>
    %cst_42 = arith.constant dense<0.000000e+00> : vector<48x32xf32>
    %79 = tpu.matmul %76, %78, %cst_42 {dimension_numbers = #tpu.dot_dimension_numbers<[1], [0], [0], [1], [0, 0, 1, 1], [], []>} : vector<48x16xbf16>, vector<16x32xbf16>, vector<48x32xf32> -> vector<48x32xf32>
    %80 = arith.addf %74, %79 : vector<48x32xf32>
    %c1_i32_43 = arith.constant 1 : i32
    %81 = tpu.dynamic_rotate %71 by %c1_i32_43 dim 0 : vector<48x16xf32>, i32 -> vector<48x16xf32>
    %82 = arith.truncf %81 : vector<48x16xf32> to vector<48x16xbf16>
    %c1_44 = arith.constant 1 : index
    %c0_45 = arith.constant 0 : index
    %c0_46 = arith.constant 0 : index
    %83 = vector.load %arg4[%c1_44, %c0_45, %c0_46] : memref<5x16x32xbf16, #tpu.memory_space<vmem>>, vector<1x16x32xbf16>
    %84 = vector.shape_cast %83 : vector<1x16x32xbf16> to vector<16x32xbf16>
    %cst_47 = arith.constant dense<0.000000e+00> : vector<48x32xf32>
    %85 = tpu.matmul %82, %84, %cst_47 {dimension_numbers = #tpu.dot_dimension_numbers<[1], [0], [0], [1], [0, 0, 1, 1], [], []>} : vector<48x16xbf16>, vector<16x32xbf16>, vector<48x32xf32> -> vector<48x32xf32>
    %86 = arith.addf %80, %85 : vector<48x32xf32>
    %87 = arith.truncf %71 : vector<48x16xf32> to vector<48x16xbf16>
    %c2_48 = arith.constant 2 : index
    %c0_49 = arith.constant 0 : index
    %c0_50 = arith.constant 0 : index
    %88 = vector.load %arg4[%c2_48, %c0_49, %c0_50] : memref<5x16x32xbf16, #tpu.memory_space<vmem>>, vector<1x16x32xbf16>
    %89 = vector.shape_cast %88 : vector<1x16x32xbf16> to vector<16x32xbf16>
    %cst_51 = arith.constant dense<0.000000e+00> : vector<48x32xf32>
    %90 = tpu.matmul %87, %89, %cst_51 {dimension_numbers = #tpu.dot_dimension_numbers<[1], [0], [0], [1], [0, 0, 1, 1], [], []>} : vector<48x16xbf16>, vector<16x32xbf16>, vector<48x32xf32> -> vector<48x32xf32>
    %91 = arith.addf %86, %90 : vector<48x32xf32>
    %c47_i32_52 = arith.constant 47 : i32
    %92 = tpu.dynamic_rotate %71 by %c47_i32_52 dim 0 : vector<48x16xf32>, i32 -> vector<48x16xf32>
    %93 = arith.truncf %92 : vector<48x16xf32> to vector<48x16xbf16>
    %c3_53 = arith.constant 3 : index
    %c0_54 = arith.constant 0 : index
    %c0_55 = arith.constant 0 : index
    %94 = vector.load %arg4[%c3_53, %c0_54, %c0_55] : memref<5x16x32xbf16, #tpu.memory_space<vmem>>, vector<1x16x32xbf16>
    %95 = vector.shape_cast %94 : vector<1x16x32xbf16> to vector<16x32xbf16>
    %cst_56 = arith.constant dense<0.000000e+00> : vector<48x32xf32>
    %96 = tpu.matmul %93, %95, %cst_56 {dimension_numbers = #tpu.dot_dimension_numbers<[1], [0], [0], [1], [0, 0, 1, 1], [], []>} : vector<48x16xbf16>, vector<16x32xbf16>, vector<48x32xf32> -> vector<48x32xf32>
    %97 = arith.addf %91, %96 : vector<48x32xf32>
    %c46_i32 = arith.constant 46 : i32
    %98 = tpu.dynamic_rotate %71 by %c46_i32 dim 0 : vector<48x16xf32>, i32 -> vector<48x16xf32>
    %99 = arith.truncf %98 : vector<48x16xf32> to vector<48x16xbf16>
    %c4_57 = arith.constant 4 : index
    %c0_58 = arith.constant 0 : index
    %c0_59 = arith.constant 0 : index
    %100 = vector.load %arg4[%c4_57, %c0_58, %c0_59] : memref<5x16x32xbf16, #tpu.memory_space<vmem>>, vector<1x16x32xbf16>
    %101 = vector.shape_cast %100 : vector<1x16x32xbf16> to vector<16x32xbf16>
    %cst_60 = arith.constant dense<0.000000e+00> : vector<48x32xf32>
    %102 = tpu.matmul %99, %101, %cst_60 {dimension_numbers = #tpu.dot_dimension_numbers<[1], [0], [0], [1], [0, 0, 1, 1], [], []>} : vector<48x16xbf16>, vector<16x32xbf16>, vector<48x32xf32> -> vector<48x32xf32>
    %103 = arith.addf %97, %102 : vector<48x32xf32>
    %104 = vector.broadcast %15 : vector<1x32xf32> to vector<48x32xf32>
    %105 = arith.mulf %41, %104 : vector<48x32xf32>
    %106 = arith.addf %105, %103 : vector<48x32xf32>
    %107 = vector.broadcast %5 : vector<48x1xf32> to vector<48x32xf32>
    %108 = arith.mulf %106, %107 : vector<48x32xf32>
    %109 = arith.mulf %108, %108 : vector<48x32xf32>
    %110 = tpu.concatenate %108, %109 in 1 : vector<48x32xf32>, vector<48x32xf32> -> vector<48x64xf32>
    %cst_61 = arith.constant dense<0.000000e+00> : vector<64xf32>
    %111 = vector.multi_reduction <add>, %110, %cst_61 [0] : vector<48x64xf32> to vector<64xf32>
    %112 = vector.shape_cast %111 : vector<64xf32> to vector<1x64xf32>
    %cst_62 = arith.constant 3.125000e-02 : f32
    %113 = vector.broadcast %cst_62 : f32 to vector<1x64xf32>
    %114 = arith.mulf %112, %113 : vector<1x64xf32>
    %115 = vector.extract_strided_slice %114 {offsets = [0, 0], sizes = [1, 32], strides = [1, 1]} : vector<1x64xf32> to vector<1x32xf32>
    %116 = vector.extract_strided_slice %114 {offsets = [0, 32], sizes = [1, 32], strides = [1, 1]} : vector<1x64xf32> to vector<1x32xf32>
    %117 = arith.mulf %115, %115 : vector<1x32xf32>
    %118 = arith.subf %116, %117 : vector<1x32xf32>
    %cst_63 = arith.constant 0.000000e+00 : f32
    %119 = vector.broadcast %cst_63 : f32 to vector<1x32xf32>
    %120 = arith.maximumf %118, %119 : vector<1x32xf32>
    %cst_64 = arith.constant 9.99999974E-6 : f32
    %121 = vector.broadcast %cst_64 : f32 to vector<1x32xf32>
    %122 = arith.addf %120, %121 : vector<1x32xf32>
    %123 = math.rsqrt %122 : vector<1x32xf32>
    %124 = vector.broadcast %115 : vector<1x32xf32> to vector<48x32xf32>
    %125 = arith.subf %108, %124 : vector<48x32xf32>
    %126 = vector.broadcast %123 : vector<1x32xf32> to vector<48x32xf32>
    %127 = arith.mulf %125, %126 : vector<48x32xf32>
    %128 = vector.broadcast %20 : vector<1x32xf32> to vector<48x32xf32>
    %129 = arith.mulf %127, %128 : vector<48x32xf32>
    %130 = vector.broadcast %21 : vector<1x32xf32> to vector<48x32xf32>
    %131 = arith.addf %129, %130 : vector<48x32xf32>
    %cst_65 = arith.constant 0.000000e+00 : f32
    %132 = vector.broadcast %cst_65 : f32 to vector<48x32xf32>
    %133 = arith.maximumf %131, %132 : vector<48x32xf32>
    %134 = vector.broadcast %5 : vector<48x1xf32> to vector<48x32xf32>
    %135 = arith.mulf %133, %134 : vector<48x32xf32>
    %c6 = arith.constant 6 : index
    %c0_66 = arith.constant 0 : index
    %136 = vector.load %arg9[%c6, %c0_66] : memref<16x32xf32, #tpu.memory_space<vmem>>, vector<1x32xf32>
    %c7 = arith.constant 7 : index
    %c0_67 = arith.constant 0 : index
    %137 = vector.load %arg9[%c7, %c0_67] : memref<16x32xf32, #tpu.memory_space<vmem>>, vector<1x16xf32>
    %c8 = arith.constant 8 : index
    %c0_68 = arith.constant 0 : index
    %138 = vector.load %arg9[%c8, %c0_68] : memref<16x32xf32, #tpu.memory_space<vmem>>, vector<1x16xf32>
    %c9 = arith.constant 9 : index
    %c0_69 = arith.constant 0 : index
    %139 = vector.load %arg9[%c9, %c0_69] : memref<16x32xf32, #tpu.memory_space<vmem>>, vector<1x32xf32>
    %c10 = arith.constant 10 : index
    %c0_70 = arith.constant 0 : index
    %140 = vector.load %arg9[%c10, %c0_70] : memref<16x32xf32, #tpu.memory_space<vmem>>, vector<1x32xf32>
    %c11 = arith.constant 11 : index
    %c0_71 = arith.constant 0 : index
    %141 = vector.load %arg9[%c11, %c0_71] : memref<16x32xf32, #tpu.memory_space<vmem>>, vector<1x32xf32>
    %cst_72 = arith.constant 0.000000e+00 : f32
    %142 = vector.broadcast %cst_72 : f32 to vector<48x32xf32>
    %143 = vector.broadcast %136 : vector<1x32xf32> to vector<48x32xf32>
    %144 = arith.addf %142, %143 : vector<48x32xf32>
    %c1_i32_73 = arith.constant 1 : i32
    %145 = tpu.dynamic_rotate %135 by %c1_i32_73 dim 0 : vector<48x32xf32>, i32 -> vector<48x32xf32>
    %146 = arith.truncf %145 : vector<48x32xf32> to vector<48x32xbf16>
    %c0_74 = arith.constant 0 : index
    %c0_75 = arith.constant 0 : index
    %c0_76 = arith.constant 0 : index
    %147 = vector.load %arg5[%c0_74, %c0_75, %c0_76] : memref<3x32x32xbf16, #tpu.memory_space<vmem>>, vector<1x32x32xbf16>
    %148 = vector.shape_cast %147 : vector<1x32x32xbf16> to vector<32x32xbf16>
    %cst_77 = arith.constant dense<0.000000e+00> : vector<48x32xf32>
    %149 = tpu.matmul %146, %148, %cst_77 {dimension_numbers = #tpu.dot_dimension_numbers<[1], [0], [0], [1], [0, 0, 1, 1], [], []>} : vector<48x32xbf16>, vector<32x32xbf16>, vector<48x32xf32> -> vector<48x32xf32>
    %150 = arith.addf %144, %149 : vector<48x32xf32>
    %151 = arith.truncf %135 : vector<48x32xf32> to vector<48x32xbf16>
    %c1_78 = arith.constant 1 : index
    %c0_79 = arith.constant 0 : index
    %c0_80 = arith.constant 0 : index
    %152 = vector.load %arg5[%c1_78, %c0_79, %c0_80] : memref<3x32x32xbf16, #tpu.memory_space<vmem>>, vector<1x32x32xbf16>
    %153 = vector.shape_cast %152 : vector<1x32x32xbf16> to vector<32x32xbf16>
    %cst_81 = arith.constant dense<0.000000e+00> : vector<48x32xf32>
    %154 = tpu.matmul %151, %153, %cst_81 {dimension_numbers = #tpu.dot_dimension_numbers<[1], [0], [0], [1], [0, 0, 1, 1], [], []>} : vector<48x32xbf16>, vector<32x32xbf16>, vector<48x32xf32> -> vector<48x32xf32>
    %155 = arith.addf %150, %154 : vector<48x32xf32>
    %c47_i32_82 = arith.constant 47 : i32
    %156 = tpu.dynamic_rotate %135 by %c47_i32_82 dim 0 : vector<48x32xf32>, i32 -> vector<48x32xf32>
    %157 = arith.truncf %156 : vector<48x32xf32> to vector<48x32xbf16>
    %c2_83 = arith.constant 2 : index
    %c0_84 = arith.constant 0 : index
    %c0_85 = arith.constant 0 : index
    %158 = vector.load %arg5[%c2_83, %c0_84, %c0_85] : memref<3x32x32xbf16, #tpu.memory_space<vmem>>, vector<1x32x32xbf16>
    %159 = vector.shape_cast %158 : vector<1x32x32xbf16> to vector<32x32xbf16>
    %cst_86 = arith.constant dense<0.000000e+00> : vector<48x32xf32>
    %160 = tpu.matmul %157, %159, %cst_86 {dimension_numbers = #tpu.dot_dimension_numbers<[1], [0], [0], [1], [0, 0, 1, 1], [], []>} : vector<48x32xbf16>, vector<32x32xbf16>, vector<48x32xf32> -> vector<48x32xf32>
    %161 = arith.addf %155, %160 : vector<48x32xf32>
    %162 = vector.extract_strided_slice %161 {offsets = [0, 8], sizes = [48, 16], strides = [1, 1]} : vector<48x32xf32> to vector<48x16xf32>
    %163 = vector.broadcast %5 : vector<48x1xf32> to vector<48x16xf32>
    %164 = arith.mulf %162, %163 : vector<48x16xf32>
    %165 = arith.mulf %164, %164 : vector<48x16xf32>
    %166 = tpu.concatenate %164, %165 in 1 : vector<48x16xf32>, vector<48x16xf32> -> vector<48x32xf32>
    %cst_87 = arith.constant dense<0.000000e+00> : vector<32xf32>
    %167 = vector.multi_reduction <add>, %166, %cst_87 [0] : vector<48x32xf32> to vector<32xf32>
    %168 = vector.shape_cast %167 : vector<32xf32> to vector<1x32xf32>
    %cst_88 = arith.constant 3.125000e-02 : f32
    %169 = vector.broadcast %cst_88 : f32 to vector<1x32xf32>
    %170 = arith.mulf %168, %169 : vector<1x32xf32>
    %171 = vector.extract_strided_slice %170 {offsets = [0, 0], sizes = [1, 16], strides = [1, 1]} : vector<1x32xf32> to vector<1x16xf32>
    %172 = vector.extract_strided_slice %170 {offsets = [0, 16], sizes = [1, 16], strides = [1, 1]} : vector<1x32xf32> to vector<1x16xf32>
    %173 = arith.mulf %171, %171 : vector<1x16xf32>
    %174 = arith.subf %172, %173 : vector<1x16xf32>
    %cst_89 = arith.constant 0.000000e+00 : f32
    %175 = vector.broadcast %cst_89 : f32 to vector<1x16xf32>
    %176 = arith.maximumf %174, %175 : vector<1x16xf32>
    %cst_90 = arith.constant 9.99999974E-6 : f32
    %177 = vector.broadcast %cst_90 : f32 to vector<1x16xf32>
    %178 = arith.addf %176, %177 : vector<1x16xf32>
    %179 = math.rsqrt %178 : vector<1x16xf32>
    %180 = vector.broadcast %171 : vector<1x16xf32> to vector<48x16xf32>
    %181 = arith.subf %164, %180 : vector<48x16xf32>
    %182 = vector.broadcast %179 : vector<1x16xf32> to vector<48x16xf32>
    %183 = arith.mulf %181, %182 : vector<48x16xf32>
    %184 = vector.broadcast %137 : vector<1x16xf32> to vector<48x16xf32>
    %185 = arith.mulf %183, %184 : vector<48x16xf32>
    %186 = vector.broadcast %138 : vector<1x16xf32> to vector<48x16xf32>
    %187 = arith.addf %185, %186 : vector<48x16xf32>
    %cst_91 = arith.constant 0.000000e+00 : f32
    %188 = vector.broadcast %cst_91 : f32 to vector<48x16xf32>
    %189 = arith.maximumf %187, %188 : vector<48x16xf32>
    %190 = vector.broadcast %5 : vector<48x1xf32> to vector<48x16xf32>
    %191 = arith.mulf %189, %190 : vector<48x16xf32>
    %cst_92 = arith.constant 0.000000e+00 : f32
    %192 = vector.broadcast %cst_92 : f32 to vector<48x32xf32>
    %193 = vector.broadcast %139 : vector<1x32xf32> to vector<48x32xf32>
    %194 = arith.addf %192, %193 : vector<48x32xf32>
    %c2_i32_93 = arith.constant 2 : i32
    %195 = tpu.dynamic_rotate %191 by %c2_i32_93 dim 0 : vector<48x16xf32>, i32 -> vector<48x16xf32>
    %196 = arith.truncf %195 : vector<48x16xf32> to vector<48x16xbf16>
    %c0_94 = arith.constant 0 : index
    %c0_95 = arith.constant 0 : index
    %c0_96 = arith.constant 0 : index
    %197 = vector.load %arg6[%c0_94, %c0_95, %c0_96] : memref<5x16x32xbf16, #tpu.memory_space<vmem>>, vector<1x16x32xbf16>
    %198 = vector.shape_cast %197 : vector<1x16x32xbf16> to vector<16x32xbf16>
    %cst_97 = arith.constant dense<0.000000e+00> : vector<48x32xf32>
    %199 = tpu.matmul %196, %198, %cst_97 {dimension_numbers = #tpu.dot_dimension_numbers<[1], [0], [0], [1], [0, 0, 1, 1], [], []>} : vector<48x16xbf16>, vector<16x32xbf16>, vector<48x32xf32> -> vector<48x32xf32>
    %200 = arith.addf %194, %199 : vector<48x32xf32>
    %c1_i32_98 = arith.constant 1 : i32
    %201 = tpu.dynamic_rotate %191 by %c1_i32_98 dim 0 : vector<48x16xf32>, i32 -> vector<48x16xf32>
    %202 = arith.truncf %201 : vector<48x16xf32> to vector<48x16xbf16>
    %c1_99 = arith.constant 1 : index
    %c0_100 = arith.constant 0 : index
    %c0_101 = arith.constant 0 : index
    %203 = vector.load %arg6[%c1_99, %c0_100, %c0_101] : memref<5x16x32xbf16, #tpu.memory_space<vmem>>, vector<1x16x32xbf16>
    %204 = vector.shape_cast %203 : vector<1x16x32xbf16> to vector<16x32xbf16>
    %cst_102 = arith.constant dense<0.000000e+00> : vector<48x32xf32>
    %205 = tpu.matmul %202, %204, %cst_102 {dimension_numbers = #tpu.dot_dimension_numbers<[1], [0], [0], [1], [0, 0, 1, 1], [], []>} : vector<48x16xbf16>, vector<16x32xbf16>, vector<48x32xf32> -> vector<48x32xf32>
    %206 = arith.addf %200, %205 : vector<48x32xf32>
    %207 = arith.truncf %191 : vector<48x16xf32> to vector<48x16xbf16>
    %c2_103 = arith.constant 2 : index
    %c0_104 = arith.constant 0 : index
    %c0_105 = arith.constant 0 : index
    %208 = vector.load %arg6[%c2_103, %c0_104, %c0_105] : memref<5x16x32xbf16, #tpu.memory_space<vmem>>, vector<1x16x32xbf16>
    %209 = vector.shape_cast %208 : vector<1x16x32xbf16> to vector<16x32xbf16>
    %cst_106 = arith.constant dense<0.000000e+00> : vector<48x32xf32>
    %210 = tpu.matmul %207, %209, %cst_106 {dimension_numbers = #tpu.dot_dimension_numbers<[1], [0], [0], [1], [0, 0, 1, 1], [], []>} : vector<48x16xbf16>, vector<16x32xbf16>, vector<48x32xf32> -> vector<48x32xf32>
    %211 = arith.addf %206, %210 : vector<48x32xf32>
    %c47_i32_107 = arith.constant 47 : i32
    %212 = tpu.dynamic_rotate %191 by %c47_i32_107 dim 0 : vector<48x16xf32>, i32 -> vector<48x16xf32>
    %213 = arith.truncf %212 : vector<48x16xf32> to vector<48x16xbf16>
    %c3_108 = arith.constant 3 : index
    %c0_109 = arith.constant 0 : index
    %c0_110 = arith.constant 0 : index
    %214 = vector.load %arg6[%c3_108, %c0_109, %c0_110] : memref<5x16x32xbf16, #tpu.memory_space<vmem>>, vector<1x16x32xbf16>
    %215 = vector.shape_cast %214 : vector<1x16x32xbf16> to vector<16x32xbf16>
    %cst_111 = arith.constant dense<0.000000e+00> : vector<48x32xf32>
    %216 = tpu.matmul %213, %215, %cst_111 {dimension_numbers = #tpu.dot_dimension_numbers<[1], [0], [0], [1], [0, 0, 1, 1], [], []>} : vector<48x16xbf16>, vector<16x32xbf16>, vector<48x32xf32> -> vector<48x32xf32>
    %217 = arith.addf %211, %216 : vector<48x32xf32>
    %c46_i32_112 = arith.constant 46 : i32
    %218 = tpu.dynamic_rotate %191 by %c46_i32_112 dim 0 : vector<48x16xf32>, i32 -> vector<48x16xf32>
    %219 = arith.truncf %218 : vector<48x16xf32> to vector<48x16xbf16>
    %c4_113 = arith.constant 4 : index
    %c0_114 = arith.constant 0 : index
    %c0_115 = arith.constant 0 : index
    %220 = vector.load %arg6[%c4_113, %c0_114, %c0_115] : memref<5x16x32xbf16, #tpu.memory_space<vmem>>, vector<1x16x32xbf16>
    %221 = vector.shape_cast %220 : vector<1x16x32xbf16> to vector<16x32xbf16>
    %cst_116 = arith.constant dense<0.000000e+00> : vector<48x32xf32>
    %222 = tpu.matmul %219, %221, %cst_116 {dimension_numbers = #tpu.dot_dimension_numbers<[1], [0], [0], [1], [0, 0, 1, 1], [], []>} : vector<48x16xbf16>, vector<16x32xbf16>, vector<48x32xf32> -> vector<48x32xf32>
    %223 = arith.addf %217, %222 : vector<48x32xf32>
    %224 = vector.broadcast %15 : vector<1x32xf32> to vector<48x32xf32>
    %225 = arith.mulf %161, %224 : vector<48x32xf32>
    %226 = arith.addf %225, %223 : vector<48x32xf32>
    %227 = vector.broadcast %5 : vector<48x1xf32> to vector<48x32xf32>
    %228 = arith.mulf %226, %227 : vector<48x32xf32>
    %229 = arith.mulf %228, %228 : vector<48x32xf32>
    %230 = tpu.concatenate %228, %229 in 1 : vector<48x32xf32>, vector<48x32xf32> -> vector<48x64xf32>
    %cst_117 = arith.constant dense<0.000000e+00> : vector<64xf32>
    %231 = vector.multi_reduction <add>, %230, %cst_117 [0] : vector<48x64xf32> to vector<64xf32>
    %232 = vector.shape_cast %231 : vector<64xf32> to vector<1x64xf32>
    %cst_118 = arith.constant 3.125000e-02 : f32
    %233 = vector.broadcast %cst_118 : f32 to vector<1x64xf32>
    %234 = arith.mulf %232, %233 : vector<1x64xf32>
    %235 = vector.extract_strided_slice %234 {offsets = [0, 0], sizes = [1, 32], strides = [1, 1]} : vector<1x64xf32> to vector<1x32xf32>
    %236 = vector.extract_strided_slice %234 {offsets = [0, 32], sizes = [1, 32], strides = [1, 1]} : vector<1x64xf32> to vector<1x32xf32>
    %237 = arith.mulf %235, %235 : vector<1x32xf32>
    %238 = arith.subf %236, %237 : vector<1x32xf32>
    %cst_119 = arith.constant 0.000000e+00 : f32
    %239 = vector.broadcast %cst_119 : f32 to vector<1x32xf32>
    %240 = arith.maximumf %238, %239 : vector<1x32xf32>
    %cst_120 = arith.constant 9.99999974E-6 : f32
    %241 = vector.broadcast %cst_120 : f32 to vector<1x32xf32>
    %242 = arith.addf %240, %241 : vector<1x32xf32>
    %243 = math.rsqrt %242 : vector<1x32xf32>
    %244 = vector.broadcast %235 : vector<1x32xf32> to vector<48x32xf32>
    %245 = arith.subf %228, %244 : vector<48x32xf32>
    %246 = vector.broadcast %243 : vector<1x32xf32> to vector<48x32xf32>
    %247 = arith.mulf %245, %246 : vector<48x32xf32>
    %248 = vector.broadcast %140 : vector<1x32xf32> to vector<48x32xf32>
    %249 = arith.mulf %247, %248 : vector<48x32xf32>
    %250 = vector.broadcast %141 : vector<1x32xf32> to vector<48x32xf32>
    %251 = arith.addf %249, %250 : vector<48x32xf32>
    %cst_121 = arith.constant 0.000000e+00 : f32
    %252 = vector.broadcast %cst_121 : f32 to vector<48x32xf32>
    %253 = arith.maximumf %251, %252 : vector<48x32xf32>
    %254 = vector.broadcast %5 : vector<48x1xf32> to vector<48x32xf32>
    %255 = arith.mulf %253, %254 : vector<48x32xf32>
    %256 = vector.shape_cast %255 : vector<48x32xf32> to vector<2x24x32xf32>
    %cst_122 = arith.constant dense<0xFF800000> : vector<2x32xf32>
    %257 = vector.multi_reduction <maximumf>, %256, %cst_122 [1] : vector<2x24x32xf32> to vector<2x32xf32>
    %258 = arith.truncf %257 : vector<2x32xf32> to vector<2x32xbf16>
    %c0_123 = arith.constant 0 : index
    %c0_124 = arith.constant 0 : index
    %259 = vector.load %arg7[%c0_123, %c0_124] : memref<32x32xbf16, #tpu.memory_space<vmem>>, vector<32x32xbf16>
    %cst_125 = arith.constant dense<0.000000e+00> : vector<2x32xf32>
    %260 = tpu.matmul %258, %259, %cst_125 {dimension_numbers = #tpu.dot_dimension_numbers<[1], [0], [0], [1], [0, 0, 1, 1], [], []>} : vector<2x32xbf16>, vector<32x32xbf16>, vector<2x32xf32> -> vector<2x32xf32>
    %c12 = arith.constant 12 : index
    %c0_126 = arith.constant 0 : index
    %261 = vector.load %arg9[%c12, %c0_126] : memref<16x32xf32, #tpu.memory_space<vmem>>, vector<1x32xf32>
    %262 = vector.broadcast %261 : vector<1x32xf32> to vector<2x32xf32>
    %263 = arith.addf %260, %262 : vector<2x32xf32>
    %cst_127 = arith.constant dense<0.000000e+00> : vector<32xf32>
    %264 = vector.multi_reduction <add>, %263, %cst_127 [0] : vector<2x32xf32> to vector<32xf32>
    %265 = vector.shape_cast %264 : vector<32xf32> to vector<1x32xf32>
    %cst_128 = arith.constant 2.000000e+00 : f32
    %266 = vector.broadcast %cst_128 : f32 to vector<1x32xf32>
    %267 = arith.divf %265, %266 : vector<1x32xf32>
    %268 = arith.mulf %263, %263 : vector<2x32xf32>
    %cst_129 = arith.constant dense<0.000000e+00> : vector<32xf32>
    %269 = vector.multi_reduction <add>, %268, %cst_129 [0] : vector<2x32xf32> to vector<32xf32>
    %270 = vector.shape_cast %269 : vector<32xf32> to vector<1x32xf32>
    %cst_130 = arith.constant 2.000000e+00 : f32
    %271 = vector.broadcast %cst_130 : f32 to vector<1x32xf32>
    %272 = arith.divf %270, %271 : vector<1x32xf32>
    %273 = arith.mulf %267, %267 : vector<1x32xf32>
    %274 = arith.subf %272, %273 : vector<1x32xf32>
    %cst_131 = arith.constant 0.000000e+00 : f32
    %275 = vector.broadcast %cst_131 : f32 to vector<1x32xf32>
    %276 = arith.maximumf %274, %275 : vector<1x32xf32>
    %cst_132 = arith.constant 9.99999974E-6 : f32
    %277 = vector.broadcast %cst_132 : f32 to vector<1x32xf32>
    %278 = arith.addf %276, %277 : vector<1x32xf32>
    %279 = math.rsqrt %278 : vector<1x32xf32>
    %280 = vector.broadcast %267 : vector<1x32xf32> to vector<2x32xf32>
    %281 = arith.subf %263, %280 : vector<2x32xf32>
    %282 = vector.broadcast %279 : vector<1x32xf32> to vector<2x32xf32>
    %283 = arith.mulf %281, %282 : vector<2x32xf32>
    %c13 = arith.constant 13 : index
    %c0_133 = arith.constant 0 : index
    %284 = vector.load %arg9[%c13, %c0_133] : memref<16x32xf32, #tpu.memory_space<vmem>>, vector<1x32xf32>
    %285 = vector.broadcast %284 : vector<1x32xf32> to vector<2x32xf32>
    %286 = arith.mulf %283, %285 : vector<2x32xf32>
    %c14 = arith.constant 14 : index
    %c0_134 = arith.constant 0 : index
    %287 = vector.load %arg9[%c14, %c0_134] : memref<16x32xf32, #tpu.memory_space<vmem>>, vector<1x32xf32>
    %288 = vector.broadcast %287 : vector<1x32xf32> to vector<2x32xf32>
    %289 = arith.addf %286, %288 : vector<2x32xf32>
    %cst_135 = arith.constant 0.000000e+00 : f32
    %290 = vector.broadcast %cst_135 : f32 to vector<2x32xf32>
    %291 = arith.maximumf %289, %290 : vector<2x32xf32>
    %292 = arith.truncf %291 : vector<2x32xf32> to vector<2x32xbf16>
    %c0_136 = arith.constant 0 : index
    %c0_137 = arith.constant 0 : index
    %293 = vector.load %arg8[%c0_136, %c0_137] : memref<32x4xbf16, #tpu.memory_space<vmem>>, vector<32x4xbf16>
    %cst_138 = arith.constant dense<0.000000e+00> : vector<2x4xf32>
    %294 = tpu.matmul %292, %293, %cst_138 {dimension_numbers = #tpu.dot_dimension_numbers<[1], [0], [0], [1], [0, 0, 1, 1], [], []>} : vector<2x32xbf16>, vector<32x4xbf16>, vector<2x4xf32> -> vector<2x4xf32>
    %c15 = arith.constant 15 : index
    %c0_139 = arith.constant 0 : index
    %295 = vector.load %arg9[%c15, %c0_139] : memref<16x32xf32, #tpu.memory_space<vmem>>, vector<1x4xf32>
    %296 = vector.broadcast %295 : vector<1x4xf32> to vector<2x4xf32>
    %297 = arith.addf %294, %296 : vector<2x4xf32>
    %c0_140 = arith.constant 0 : index
    %c0_141 = arith.constant 0 : index
    %298 = vector.load %arg10[%c0_140, %c0_141] : memref<2x4xf32, #tpu.memory_space<vmem>>, vector<2x4xf32>
    tpu.vector_store %arg10[%c0_140, %c0_141], %297 {strides = array<i32>} : memref<2x4xf32, #tpu.memory_space<vmem>>, vector<2x4xf32>,
    return
  }
  func.func @transform_0(%arg0: i32, %arg1: memref<32xi32, #tpu.memory_space<smem>>) -> (i32, i32) {
    %c0_i32 = arith.constant 0 : i32
    %c0_i32_0 = arith.constant 0 : i32
    %c0_i32_1 = arith.constant 0 : i32
    return %c0_i32, %c0_i32_0 : i32, i32
  }
  func.func @transform_1(%arg0: i32, %arg1: memref<32xi32, #tpu.memory_space<smem>>) -> (i32, i32, i32) {
    %c0_i32 = arith.constant 0 : i32
    %c0_i32_0 = arith.constant 0 : i32
    %c0_i32_1 = arith.constant 0 : i32
    %c0_i32_2 = arith.constant 0 : i32
    return %c0_i32, %c0_i32_0, %c0_i32_1 : i32, i32, i32
  }
  func.func @transform_2(%arg0: i32, %arg1: memref<32xi32, #tpu.memory_space<smem>>) -> (i32, i32, i32) {
    %c0_i32 = arith.constant 0 : i32
    %c0_i32_0 = arith.constant 0 : i32
    %c0_i32_1 = arith.constant 0 : i32
    %c0_i32_2 = arith.constant 0 : i32
    return %c0_i32, %c0_i32_0, %c0_i32_1 : i32, i32, i32
  }
  func.func @transform_3(%arg0: i32, %arg1: memref<32xi32, #tpu.memory_space<smem>>) -> (i32, i32, i32) {
    %c0_i32 = arith.constant 0 : i32
    %c0_i32_0 = arith.constant 0 : i32
    %c0_i32_1 = arith.constant 0 : i32
    %c0_i32_2 = arith.constant 0 : i32
    return %c0_i32, %c0_i32_0, %c0_i32_1 : i32, i32, i32
  }
  func.func @transform_4(%arg0: i32, %arg1: memref<32xi32, #tpu.memory_space<smem>>) -> (i32, i32, i32) {
    %c0_i32 = arith.constant 0 : i32
    %c0_i32_0 = arith.constant 0 : i32
    %c0_i32_1 = arith.constant 0 : i32
    %c0_i32_2 = arith.constant 0 : i32
    return %c0_i32, %c0_i32_0, %c0_i32_1 : i32, i32, i32
  }
  func.func @transform_5(%arg0: i32, %arg1: memref<32xi32, #tpu.memory_space<smem>>) -> (i32, i32) {
    %c0_i32 = arith.constant 0 : i32
    %c0_i32_0 = arith.constant 0 : i32
    %c0_i32_1 = arith.constant 0 : i32
    return %c0_i32, %c0_i32_0 : i32, i32
  }
  func.func @transform_6(%arg0: i32, %arg1: memref<32xi32, #tpu.memory_space<smem>>) -> (i32, i32) {
    %c0_i32 = arith.constant 0 : i32
    %c0_i32_0 = arith.constant 0 : i32
    %c0_i32_1 = arith.constant 0 : i32
    return %c0_i32, %c0_i32_0 : i32, i32
  }
  func.func @transform_7(%arg0: i32, %arg1: memref<32xi32, #tpu.memory_space<smem>>) -> (i32, i32) {
    %c0_i32 = arith.constant 0 : i32
    %c0_i32_0 = arith.constant 0 : i32
    %c0_i32_1 = arith.constant 0 : i32
    return %c0_i32, %c0_i32_0 : i32, i32
  }
  func.func @transform_8(%arg0: i32, %arg1: memref<32xi32, #tpu.memory_space<smem>>) -> (i32, i32) {
    %c0_i32 = arith.constant 0 : i32
    %c0_i32_0 = arith.constant 0 : i32
    %c0_i32_1 = arith.constant 0 : i32
    return %c0_i32, %c0_i32_0 : i32, i32
  }
}

</mosaic_0001>

<llo_original>
// kernel: textcnn_forward.1
$region0: #{textcnn_forward.1}
  #allocation0 [shape = 'u32[]', space=smem, size = 0x4, offset = 0x4, fixed_abs, tag = 'smem constant byte address 0x4 - core index']
  #allocation1 [shape = 'u32[144,128]{1,0:T(1,128)}', space=vmem, size = 0x12000, scoped, tag = 'internal scratch']
  #allocation2 [shape = 'f32[48,16]{1,0:T(8,128)}', space=vmem, size = 0x6000, scoped, tag = 'scratch operand']
  #allocation3 [shape = 'f32[48,1]{1,0:T(8,128)}', space=vmem, size = 0x6000, scoped, tag = 'scratch operand']
  #allocation4 [shape = 's32[1]{0}', space=sflag, size = 0x4, scoped, tag = 'scoped memory for textcnn_forward.1']
  #allocation5 [shape = 'u8[512]{0}', space=smem, size = 0x200, scoped, tag = 'prefetched SMEM operand 0']
  %s0 = inlined_call_operand.vmem [shape: s32[32], index: 0, kind: input, shape index: {}]
  %s1 = inlined_call_operand.vmem [shape: f32[100,16], index: 1, kind: input, shape index: {}]
  %s2 = inlined_call_operand.vmem [shape: bf16[3,16,32], index: 2, kind: input, shape index: {}]
  %s3 = inlined_call_operand.vmem [shape: bf16[5,16,32], index: 3, kind: input, shape index: {}]
  %s4 = inlined_call_operand.vmem [shape: bf16[3,32,32], index: 4, kind: input, shape index: {}]
  %s5 = inlined_call_operand.vmem [shape: bf16[5,16,32], index: 5, kind: input, shape index: {}]
  %s6 = inlined_call_operand.vmem [shape: bf16[32,32], index: 6, kind: input, shape index: {}]
  %s7 = inlined_call_operand.vmem [shape: bf16[32,4], index: 7, kind: input, shape index: {}]
  %s8 = inlined_call_operand.vmem [shape: f32[16,32], index: 8, kind: input, shape index: {}]
  %s9 = inlined_call_operand.hbm [shape: f32[2,4], index: 9, kind: output, shape index: {}]
  %s10 = sld [smem:[#allocation0]]
  $region56: #{textcnn_forward.1} parent=0
    _
  %s12 = ssub.s32 1, %s10
  %s13 = scalar_select 0, %s12, %s10
  %s14 = sshll.u32 %s0, 4
  %s15 = int_to_ptr.vmem [resolvable:$true] %s14
  %17 = dma.vmem_to_smem %s15, 16, [#allocation5], [#allocation4]
  %18 = dma.done [#allocation4], 16
  %19 = sfence
  $region1: #{textcnn_forward.1} parent=0
    #allocation6 [shape = 'u8[1024]{0}', space=vmem, size = 0x400, scoped, tag = 'output window, operand 0, single buffered']
    #allocation7 [shape = 's32[1]{0}', space=sflag, size = 0x4, scoped, tag = 'scoped memory for textcnn_forward.1']
    %20 = vsyncpa [#allocation7], 0
    // Predicated region
    $region2: #{textcnn_forward.1} parent=1 // pred_check
      _
    $region3: #{textcnn_forward.1} parent=1 // pred_check_branch
      %22 = sbr.rel (0) target = $region5
    $region4: #{textcnn_forward.1} parent=1 // pred_region
      _
    $region5: #{textcnn_forward.1} parent=1 // pred_fallthru
      _
    // Predicated region
    $region6: #{textcnn_forward.1} parent=1 // pred_check
      _
    $region7: #{textcnn_forward.1} parent=1 // pred_check_branch
      %24 = sbr.rel (0) target = $region9
    $region8: #{textcnn_forward.1} parent=1 // pred_region
      _
    $region9: #{textcnn_forward.1} parent=1 // pred_fallthru
      _
    // Predicated region
    $region10: #{textcnn_forward.1} parent=1 // pred_check
      _
    $region11: #{textcnn_forward.1} parent=1 // pred_check_branch
      %26 = sbr.rel (0) target = $region13
    $region12: #{textcnn_forward.1} parent=1 // pred_region
      _
    $region13: #{textcnn_forward.1} parent=1 // pred_fallthru
      _
    // Predicated region
    $region14: #{textcnn_forward.1} parent=1 // pred_check
      _
    $region15: #{textcnn_forward.1} parent=1 // pred_check_branch
      %28 = sbr.rel (0) target = $region17
    $region16: #{textcnn_forward.1} parent=1 // pred_region
      _
    $region17: #{textcnn_forward.1} parent=1 // pred_fallthru
      _
    // Predicated region
    $region18: #{textcnn_forward.1} parent=1 // pred_check
      _
    $region19: #{textcnn_forward.1} parent=1 // pred_check_branch
      %30 = sbr.rel (0) target = $region21
    $region20: #{textcnn_forward.1} parent=1 // pred_region
      _
    $region21: #{textcnn_forward.1} parent=1 // pred_fallthru
      _
    // Predicated region
    $region22: #{textcnn_forward.1} parent=1 // pred_check
      _
    $region23: #{textcnn_forward.1} parent=1 // pred_check_branch
      %32 = sbr.rel (0) target = $region25
    $region24: #{textcnn_forward.1} parent=1 // pred_region
      _
    $region25: #{textcnn_forward.1} parent=1 // pred_fallthru
      _
    // Predicated region
    $region26: #{textcnn_forward.1} parent=1 // pred_check
      _
    $region27: #{textcnn_forward.1} parent=1 // pred_check_branch
      %34 = sbr.rel (0) target = $region29
    $region28: #{textcnn_forward.1} parent=1 // pred_region
      _
    $region29: #{textcnn_forward.1} parent=1 // pred_fallthru
      _
    // Predicated region
    $region30: #{textcnn_forward.1} parent=1 // pred_check
      _
    $region31: #{textcnn_forward.1} parent=1 // pred_check_branch
      %36 = sbr.rel (0) target = $region33
    $region32: #{textcnn_forward.1} parent=1 // pred_region
      _
    $region33: #{textcnn_forward.1} parent=1 // pred_fallthru
      _
    %vm38 = vcmask 130048
    %39 = vst.msk [vmem:[#allocation2] sm:$0xff] %vm38, 0.0
    %40 = vst.msk [vmem:[#allocation2 + $0x8] sm:$0xff] %vm38, 0.0
    %41 = vst.msk [vmem:[#allocation2 + $0x10] sm:$0xff] %vm38, 0.0
    %42 = vst.msk [vmem:[#allocation2 + $0x18] sm:$0xff] %vm38, 0.0
    %43 = vst.msk [vmem:[#allocation2 + $0x20] sm:$0xff] %vm38, 0.0
    %44 = vst.msk [vmem:[#allocation2 + $0x28] sm:$0xff] %vm38, 0.0
    %vm45 = vcmask 7168
    %46 = vst.msk [vmem:[#allocation3] sm:$0xff] %vm45, 0.0
    %47 = vst.msk [vmem:[#allocation3 + $0x8] sm:$0xff] %vm45, 0.0
    %48 = vst.msk [vmem:[#allocation3 + $0x10] sm:$0xff] %vm45, 0.0
    %49 = vst.msk [vmem:[#allocation3 + $0x18] sm:$0xff] %vm45, 0.0
    %50 = vst.msk [vmem:[#allocation3 + $0x20] sm:$0xff] %vm45, 0.0
    %51 = vst.msk [vmem:[#allocation3 + $0x28] sm:$0xff] %vm45, 0.0
    loop: start=0, step=1, limit=2
    $region34: #{textcnn_forward.1} parent=1 // loop_pre_header
      _
    $region35: #{textcnn_forward.1} parent=1 // loop_header
      %s53 = sphi 0, %s57
      %p54 = scmp.ge.s32.totalorder %s53, 2
    $region36: #{textcnn_forward.1} parent=1 // loop_header_branch
      %56 = sbr.rel (%p54) target = $region40
    $region37: #{textcnn_forward.1} parent=1 // loop_body
      %s58 = smul.u32 %s53, 24
      %s59 = sadd.s32 %s58, 2
      %s60 = scalar_lea.vmem [#allocation3], %s59
      %61 = vst.msk [vmem:[%s60] sm:$0xff] %vm45, 1.0
      %62 = vst.msk [vmem:[%s60 + $0x8] sm:$0xff] %vm45, 1.0
      loop: start=0, step=1, limit=16
      $region41: #{textcnn_forward.1} parent=37 // loop_pre_header
        _
      $region42: #{textcnn_forward.1} parent=37 // loop_header
        %s64 = sphi 0, %s68
        %p65 = scmp.ge.s32.totalorder %s64, 16
      $region43: #{textcnn_forward.1} parent=37 // loop_header_branch
        %67 = sbr.rel (%p65) target = $region47
      $region44: #{textcnn_forward.1} parent=37 // loop_body
        %s69 = smul.u32 %s53, 16
        %s70 = sadd.s32 %s69, %s64
        %s71 = sld [smem:[#allocation5 + %s70]]
        %s72 = scalar_lea.vmem %s1, %s71
        %v73 = vld [vmem:[%s72] sm:$0x1]
        %s74 = sadd.s32 %s59, %s64
        %s75 = scalar_lea.vmem [#allocation2], %s74
        %vm76 = vcmask 122880
        %77 = vst.msk [vmem:[%s75] sm:$0x1] %vm76, %v73
      $region45: #{textcnn_forward.1} parent=37 // loop_footer
        %s68 = sadd.s32 1, %s64
      $region46: #{textcnn_forward.1} parent=37 // loop_footer_branch
        %63 = sbr.rel target = $region42
      $region47: #{textcnn_forward.1} parent=37 // loop_exit
        _
    $region38: #{textcnn_forward.1} parent=1 // loop_footer
      %s57 = sadd.s32 1, %s53
    $region39: #{textcnn_forward.1} parent=1 // loop_footer_branch
      %52 = sbr.rel target = $region35
    $region40: #{textcnn_forward.1} parent=1 // loop_exit
      _
    %v78 = vld [vmem:[#allocation3] sm:$0xff]
    %v79 = vld [vmem:[#allocation3 + $0x8] sm:$0xff]
    %v80 = vld [vmem:[#allocation3 + $0x10] sm:$0xff]
    %v81 = vld [vmem:[#allocation3 + $0x18] sm:$0xff]
    %v82 = vld [vmem:[#allocation3 + $0x20] sm:$0xff]
    %v83 = vld [vmem:[#allocation3 + $0x28] sm:$0xff]
    %v84 = vld [vmem:[#allocation2] sm:$0xff]
    %v85 = vld [vmem:[#allocation2 + $0x8] sm:$0xff]
    %v86 = vld [vmem:[#allocation2 + $0x10] sm:$0xff]
    %v87 = vld [vmem:[#allocation2 + $0x18] sm:$0xff]
    %v88 = vld [vmem:[#allocation2 + $0x20] sm:$0xff]
    %v89 = vld [vmem:[#allocation2 + $0x28] sm:$0xff]
    %v90 = vlaneseq
    %v91 = vand.u32 %v90, 127
    %vm92 = vcmp.lt.s32.totalorder %v91, 8
    %vm93 = vcmp.ge.s32.totalorder %v91, 24
    %vm94 = vmor %vm92, %vm93
    %v95 = vsel %vm94, 1.0, 0.0
    %v96 = vld [vmem:[%s8] sm:$0x1]
    %v97 = vld [vmem:[%s8 + $0x1] sm:$0x1]
    %v98 = vld [vmem:[%s8 + $0x2] sm:$0x1]
    %v99 = vld [vmem:[%s8 + $0x3] sm:$0x1]
    %v100 = vld [vmem:[%s8 + $0x4] sm:$0x1]
    %v101 = vld [vmem:[%s8 + $0x5] sm:$0x1]
    %v102 = vlaneseq
    %v103 = vshrl.u32 %v102, 7
    %v104 = vsub.s32 0, %v103
    %v105 = vrot.slane %v96, %v104
    %v106 = vadd.f32 %v105, 0.0
    %v107 = vrot.slane %v84, 7
    %v108 = vrot.slane %v85, 7
    %v109 = vrot.slane %v86, 7
    %v110 = vrot.slane %v87, 7
    %v111 = vrot.slane %v88, 7
    %v112 = vrot.slane %v89, 7
    %v113 = vlaneseq
    %v114 = vshrl.u32 %v113, 7
    %vm115 = vcmp.lt.s32.totalorder %v114, 1
    %v116 = vsel %vm115, %v111, %v112
    %v117 = vsel %vm115, %v110, %v111
    %v118 = vsel %vm115, %v109, %v110
    %v119 = vsel %vm115, %v108, %v109
    %v120 = vsel %vm115, %v107, %v108
    %v121 = vsel %vm115, %v112, %v107
    %v122 = vpack.c.bf16 %v120, %v121
    %v123 = vpack.c.bf16 %v118, %v119
    %v124 = vpack.c.bf16 %v116, %v117
    %v125 = vld [vmem:[%s2] sm:$0xf]
    %v126 = vld [vmem:[%s2 + $0x4] sm:$0xf]
    %v129 = vunpack.c.l.b16 %v125
    %v130 = vunpack.c.l.b16 %v126
    %v131 = vpack.c.b16 %v130, %v129
    %v134 = vsel %vm38, %v122, 0
    %v137 = vsel %vm38, %v123, 0
    %v140 = vsel %vm38, %v124, 0
    %142 = vmatprep.subr.bf16.mxu0 0
    %143 = vmatpush1.bf16.msra.mxu0 0
    %144 = vmatprep.subr.bf16.mxu0 0
    %145 = vmatpush1.bf16.msra.mxu0 0
    %146 = vmatprep.subr.bf16.mxu0 0
    %147 = vmatpush1.bf16.msra.mxu0 0
    %148 = vmatprep.subr.bf16.mxu0 0
    %149 = vmatpush1.bf16.msra.mxu0 0
    %150 = vmatprep.subr.bf16.mxu0 0
    %151 = vmatpush1.bf16.msra.mxu0 0
    %152 = vmatprep.subr.bf16.mxu0 0
    %153 = vmatpush1.bf16.msra.mxu0 0
    %154 = vmatprep.subr.bf16.mxu0 0
    %155 = vmatpush1.bf16.msra.mxu0 0
    %156 = vmatprep.subr.bf16.mxu0 0
    %157 = vmatpush1.bf16.msra.mxu0 %v131
    %158 = vmatprep.subr.bf16.mxu0 0
    %159 = vmatpush2.bf16.msra.mxu0 0
    %160 = vmatprep.subr.bf16.mxu0 0
    %161 = vmatpush2.bf16.msra.mxu0 0
    %162 = vmatprep.subr.bf16.mxu0 0
    %163 = vmatpush2.bf16.msra.mxu0 0
    %164 = vmatprep.subr.bf16.mxu0 0
    %165 = vmatpush2.bf16.msra.mxu0 0
    %166 = vmatprep.subr.bf16.mxu0 0
    %167 = vmatpush2.bf16.msra.mxu0 0
    %168 = vmatprep.subr.bf16.mxu0 0
    %169 = vmatpush2.bf16.msra.mxu0 0
    %170 = vmatprep.subr.bf16.mxu0 0
    %171 = vmatpush2.bf16.msra.mxu0 0
    %172 = vmatprep.subr.bf16.mxu0 0
    %173 = vmatpush2.bf16.msra.mxu0 0
    %174 = vmatprep.mubr.bf16.mxu0 0
    %175 = vmatmul.mubr.bf16.gmra.mxu0 %v134
    %v176 = vpop.f32.mrf.mxu0
    %v177 = vadd.f32 0.0, %v176
    %v178 = vpop.f32.mrf.mxu0
    %v179 = vpop.f32.mrf.mxu0
    %v180 = vadd.f32 0.0, %v179
    %v181 = vpop.f32.mrf.mxu0
    %182 = vmatprep.mubr.bf16.mxu0 0
    %183 = vmatmul.mubr.bf16.gmra.mxu0 %v137
    %v184 = vpop.f32.mrf.mxu0
    %v185 = vadd.f32 0.0, %v184
    %v186 = vpop.f32.mrf.mxu0
    %v187 = vpop.f32.mrf.mxu0
    %v188 = vadd.f32 0.0, %v187
    %v189 = vpop.f32.mrf.mxu0
    %190 = vmatprep.mubr.bf16.mxu0 0
    %191 = vmatmul.mubr.bf16.gmra.mxu0 %v140
    %v192 = vpop.f32.mrf.mxu0
    %v193 = vadd.f32 0.0, %v192
    %v194 = vpop.f32.mrf.mxu0
    %v195 = vpop.f32.mrf.mxu0
    %v196 = vadd.f32 0.0, %v195
    %v197 = vpop.f32.mrf.mxu0
    %198 = vdwg.mxu0
    %v199 = vadd.f32 %v106, %v177
    %v200 = vadd.f32 %v106, %v180
    %v201 = vadd.f32 %v106, %v185
    %v202 = vadd.f32 %v106, %v188
    %v203 = vadd.f32 %v106, %v193
    %v204 = vadd.f32 %v106, %v196
    %v205 = vpack.c.bf16 %v85, %v84
    %v206 = vpack.c.bf16 %v87, %v86
    %v207 = vpack.c.bf16 %v89, %v88
    %s208 = scalar_lea.vmem %s2, 8
    %v209 = vld [vmem:[%s208] sm:$0xf]
    %v210 = vld [vmem:[%s208 + $0x4] sm:$0xf]
    %v213 = vunpack.c.l.b16 %v209
    %v214 = vunpack.c.l.b16 %v210
    %v215 = vpack.c.b16 %v214, %v213
    %v218 = vsel %vm38, %v205, 0
    %v221 = vsel %vm38, %v206, 0
    %v224 = vsel %vm38, %v207, 0
    %226 = vmatprep.subr.bf16.mxu0 0
    %227 = vmatpush1.bf16.msra.mxu0 0
    %228 = vmatprep.subr.bf16.mxu0 0
    %229 = vmatpush1.bf16.msra.mxu0 0
    %230 = vmatprep.subr.bf16.mxu0 0
    %231 = vmatpush1.bf16.msra.mxu0 0
    %232 = vmatprep.subr.bf16.mxu0 0
    %233 = vmatpush1.bf16.msra.mxu0 0
    %234 = vmatprep.subr.bf16.mxu0 0
    %235 = vmatpush1.bf16.msra.mxu0 0
    %236 = vmatprep.subr.bf16.mxu0 0
    %237 = vmatpush1.bf16.msra.mxu0 0
    %238 = vmatprep.subr.bf16.mxu0 0
    %239 = vmatpush1.bf16.msra.mxu0 0
    %240 = vmatprep.subr.bf16.mxu0 0
    %241 = vmatpush1.bf16.msra.mxu0 %v215
    %242 = vmatprep.subr.bf16.mxu0 0
    %243 = vmatpush2.bf16.msra.mxu0 0
    %244 = vmatprep.subr.bf16.mxu0 0
    %245 = vmatpush2.bf16.msra.mxu0 0
    %246 = vmatprep.subr.bf16.mxu0 0
    %247 = vmatpush2.bf16.msra.mxu0 0
    %248 = vmatprep.subr.bf16.mxu0 0
    %249 = vmatpush2.bf16.msra.mxu0 0
    %250 = vmatprep.subr.bf16.mxu0 0
    %251 = vmatpush2.bf16.msra.mxu0 0
    %252 = vmatprep.subr.bf16.mxu0 0
    %253 = vmatpush2.bf16.msra.mxu0 0
    %254 = vmatprep.subr.bf16.mxu0 0
    %255 = vmatpush2.bf16.msra.mxu0 0
    %256 = vmatprep.subr.bf16.mxu0 0
    %257 = vmatpush2.bf16.msra.mxu0 0
    %258 = vmatprep.mubr.bf16.mxu0 0
    %259 = vmatmul.mubr.bf16.gmra.mxu0 %v218
    %v260 = vpop.f32.mrf.mxu0
    %v261 = vadd.f32 0.0, %v260
    %v262 = vpop.f32.mrf.mxu0
    %v263 = vpop.f32.mrf.mxu0
    %v264 = vadd.f32 0.0, %v263
    %v265 = vpop.f32.mrf.mxu0
    %266 = vmatprep.mubr.bf16.mxu0 0
    %267 = vmatmul.mubr.bf16.gmra.mxu0 %v221
    %v268 = vpop.f32.mrf.mxu0
    %v269 = vadd.f32 0.0, %v268
    %v270 = vpop.f32.mrf.mxu0
    %v271 = vpop.f32.mrf.mxu0
    %v272 = vadd.f32 0.0, %v271
    %v273 = vpop.f32.mrf.mxu0
    %274 = vmatprep.mubr.bf16.mxu0 0
    %275 = vmatmul.mubr.bf16.gmra.mxu0 %v224
    %v276 = vpop.f32.mrf.mxu0
    %v277 = vadd.f32 0.0, %v276
    %v278 = vpop.f32.mrf.mxu0
    %v279 = vpop.f32.mrf.mxu0
    %v280 = vadd.f32 0.0, %v279
    %v281 = vpop.f32.mrf.mxu0
    %282 = vdwg.mxu0
    %v283 = vadd.f32 %v199, %v261
    %v284 = vadd.f32 %v200, %v264
    %v285 = vadd.f32 %v201, %v269
    %v286 = vadd.f32 %v202, %v272
    %v287 = vadd.f32 %v203, %v277
    %v288 = vadd.f32 %v204, %v280
    %v289 = vrot.slane %v84, 1
    %v290 = vrot.slane %v85, 1
    %v291 = vrot.slane %v86, 1
    %v292 = vrot.slane %v87, 1
    %v293 = vrot.slane %v88, 1
    %v294 = vrot.slane %v89, 1
    %vm295 = vcmp.lt.s32.totalorder %v114, 7
    %v296 = vsel %vm295, %v293, %v294
    %v297 = vsel %vm295, %v292, %v293
    %v298 = vsel %vm295, %v291, %v292
    %v299 = vsel %vm295, %v290, %v291
    %v300 = vsel %vm295, %v289, %v290
    %v301 = vsel %vm295, %v294, %v289
    %v302 = vpack.c.bf16 %v299, %v300
    %v303 = vpack.c.bf16 %v297, %v298
    %v304 = vpack.c.bf16 %v301, %v296
    %s305 = scalar_lea.vmem %s2, 16
    %v306 = vld [vmem:[%s305] sm:$0xf]
    %v307 = vld [vmem:[%s305 + $0x4] sm:$0xf]
    %v310 = vunpack.c.l.b16 %v306
    %v311 = vunpack.c.l.b16 %v307
    %v312 = vpack.c.b16 %v311, %v310
    %v315 = vsel %vm38, %v302, 0
    %v318 = vsel %vm38, %v303, 0
    %v321 = vsel %vm38, %v304, 0
    %323 = vmatprep.subr.bf16.mxu0 0
    %324 = vmatpush1.bf16.msra.mxu0 0
    %325 = vmatprep.subr.bf16.mxu0 0
    %326 = vmatpush1.bf16.msra.mxu0 0
    %327 = vmatprep.subr.bf16.mxu0 0
    %328 = vmatpush1.bf16.msra.mxu0 0
    %329 = vmatprep.subr.bf16.mxu0 0
    %330 = vmatpush1.bf16.msra.mxu0 0
    %331 = vmatprep.subr.bf16.mxu0 0
    %332 = vmatpush1.bf16.msra.mxu0 0
    %333 = vmatprep.subr.bf16.mxu0 0
    %334 = vmatpush1.bf16.msra.mxu0 0
    %335 = vmatprep.subr.bf16.mxu0 0
    %336 = vmatpush1.bf16.msra.mxu0 0
    %337 = vmatprep.subr.bf16.mxu0 0
    %338 = vmatpush1.bf16.msra.mxu0 %v312
    %339 = vmatprep.subr.bf16.mxu0 0
    %340 = vmatpush2.bf16.msra.mxu0 0
    %341 = vmatprep.subr.bf16.mxu0 0
    %342 = vmatpush2.bf16.msra.mxu0 0
    %343 = vmatprep.subr.bf16.mxu0 0
    %344 = vmatpush2.bf16.msra.mxu0 0
    %345 = vmatprep.subr.bf16.mxu0 0
    %346 = vmatpush2.bf16.msra.mxu0 0
    %347 = vmatprep.subr.bf16.mxu0 0
    %348 = vmatpush2.bf16.msra.mxu0 0
    %349 = vmatprep.subr.bf16.mxu0 0
    %350 = vmatpush2.bf16.msra.mxu0 0
    %351 = vmatprep.subr.bf16.mxu0 0
    %352 = vmatpush2.bf16.msra.mxu0 0
    %353 = vmatprep.subr.bf16.mxu0 0
    %354 = vmatpush2.bf16.msra.mxu0 0
    %355 = vmatprep.mubr.bf16.mxu0 0
    %356 = vmatmul.mubr.bf16.gmra.mxu0 %v315
    %v357 = vpop.f32.mrf.mxu0
    %v358 = vadd.f32 0.0, %v357
    %v359 = vpop.f32.mrf.mxu0
    %v360 = vpop.f32.mrf.mxu0
    %v361 = vadd.f32 0.0, %v360
    %v362 = vpop.f32.mrf.mxu0
    %363 = vmatprep.mubr.bf16.mxu0 0
    %364 = vmatmul.mubr.bf16.gmra.mxu0 %v318
    %v365 = vpop.f32.mrf.mxu0
    %v366 = vadd.f32 0.0, %v365
    %v367 = vpop.f32.mrf.mxu0
    %v368 = vpop.f32.mrf.mxu0
    %v369 = vadd.f32 0.0, %v368
    %v370 = vpop.f32.mrf.mxu0
    %371 = vmatprep.mubr.bf16.mxu0 0
    %372 = vmatmul.mubr.bf16.gmra.mxu0 %v321
    %v373 = vpop.f32.mrf.mxu0
    %v374 = vadd.f32 0.0, %v373
    %v375 = vpop.f32.mrf.mxu0
    %v376 = vpop.f32.mrf.mxu0
    %v377 = vadd.f32 0.0, %v376
    %v378 = vpop.f32.mrf.mxu0
    %379 = vdwg.mxu0
    %v380 = vadd.f32 %v283, %v358
    %v381 = vadd.f32 %v284, %v361
    %v382 = vadd.f32 %v285, %v366
    %v383 = vadd.f32 %v286, %v369
    %v384 = vadd.f32 %v287, %v374
    %v385 = vadd.f32 %v288, %v377
    %387 = vset.pattern.permute.xlu0 0
    %388 = vperm.xlu0 %387, %v78
    %v389 = vpop.permute.xlu0 %388
    %392 = vset.pattern.permute.xlu0 0
    %393 = vperm.xlu0 %392, %v79
    %v394 = vpop.permute.xlu0 %393
    %397 = vset.pattern.permute.xlu0 0
    %398 = vperm.xlu0 %397, %v80
    %v399 = vpop.permute.xlu0 %398
    %402 = vset.pattern.permute.xlu0 0
    %403 = vperm.xlu0 %402, %v81
    %v404 = vpop.permute.xlu0 %403
    %407 = vset.pattern.permute.xlu0 0
    %408 = vperm.xlu0 %407, %v82
    %v409 = vpop.permute.xlu0 %408
    %412 = vset.pattern.permute.xlu0 0
    %413 = vperm.xlu0 %412, %v83
    %v414 = vpop.permute.xlu0 %413
    %v416 = vmul.f32 %v380, %v389
    %v417 = vmul.f32 %v381, %v394
    %v418 = vmul.f32 %v382, %v399
    %v419 = vmul.f32 %v383, %v404
    %v420 = vmul.f32 %v384, %v409
    %v421 = vmul.f32 %v385, %v414
    %v422 = vmul.f32 %v416, %v416
    %v423 = vmul.f32 %v417, %v417
    %v424 = vmul.f32 %v418, %v418
    %v425 = vmul.f32 %v419, %v419
    %v426 = vmul.f32 %v420, %v420
    %v427 = vmul.f32 %v421, %v421
    %434 = vrot.lane.b32.xlu0 %v416, 120
    %v435 = vpop.permute.xlu0 %434
    %436 = vrot.lane.b32.xlu0 %v417, 120
    %v437 = vpop.permute.xlu0 %436
    %438 = vrot.lane.b32.xlu0 %v418, 120
    %v439 = vpop.permute.xlu0 %438
    %440 = vrot.lane.b32.xlu0 %v419, 120
    %v441 = vpop.permute.xlu0 %440
    %442 = vrot.lane.b32.xlu0 %v420, 120
    %v443 = vpop.permute.xlu0 %442
    %444 = vrot.lane.b32.xlu0 %v421, 120
    %v445 = vpop.permute.xlu0 %444
    %458 = vrot.lane.b32.xlu0 %v422, 8
    %v459 = vpop.permute.xlu0 %458
    %460 = vrot.lane.b32.xlu0 %v423, 8
    %v461 = vpop.permute.xlu0 %460
    %462 = vrot.lane.b32.xlu0 %v424, 8
    %v463 = vpop.permute.xlu0 %462
    %464 = vrot.lane.b32.xlu0 %v425, 8
    %v465 = vpop.permute.xlu0 %464
    %466 = vrot.lane.b32.xlu0 %v426, 8
    %v467 = vpop.permute.xlu0 %466
    %468 = vrot.lane.b32.xlu0 %v427, 8
    %v469 = vpop.permute.xlu0 %468
    %v476 = vsel %vm38, %v435, %v459
    %v477 = vsel %vm38, %v437, %v461
    %v478 = vsel %vm38, %v439, %v463
    %v479 = vsel %vm38, %v441, %v465
    %v480 = vsel %vm38, %v443, %v467
    %v481 = vsel %vm38, %v445, %v469
    %vm482 = vcmask 261120
    %v483 = vsel %vm482, %v476, 0.0
    %v484 = vsel %vm482, %v477, 0.0
    %v485 = vadd.f32 %v483, %v484
    %v486 = vsel %vm482, %v478, 0.0
    %v487 = vadd.f32 %v485, %v486
    %v488 = vsel %vm482, %v479, 0.0
    %v489 = vadd.f32 %v487, %v488
    %v490 = vsel %vm482, %v480, 0.0
    %v491 = vadd.f32 %v489, %v490
    %v492 = vsel %vm482, %v481, 0.0
    %v493 = vadd.f32 %v491, %v492
    %v494 = vrot.slane %v493, 4
    %v495 = vadd.f32 %v493, %v494
    %v496 = vrot.slane %v495, 2
    %v497 = vadd.f32 %v495, %v496
    %v498 = vrot.slane %v497, 1
    %v499 = vadd.f32 %v497, %v498
    %v500 = vmul.f32 %v499, 0.03125
    %v501 = vmul.f32 %v500, %v500
    %503 = vrot.lane.b32.xlu0 %v501, 16
    %v504 = vpop.permute.xlu0 %503
    %v506 = vsub.f32 %v500, %v504
    %v507 = vmax.f32 %v506, 0.0
    %v508 = vadd.f32 %v507, 1e-05
    %v509 = vrsqrt.pop %v508
    %511 = vrot.lane.b32.xlu0 %v500, 8
    %v512 = vpop.permute.xlu0 %511
    %v514 = vsub.f32 %v416, %v512
    %v515 = vsub.f32 %v417, %v512
    %v516 = vsub.f32 %v418, %v512
    %v517 = vsub.f32 %v419, %v512
    %v518 = vsub.f32 %v420, %v512
    %v519 = vsub.f32 %v421, %v512
    %v520 = vlaneseq
    %v521 = vshrl.u32 %v520, 7
    %v522 = vsub.s32 0, %v521
    %v523 = vrot.slane %v509, %v522
    %525 = vrot.lane.b32.xlu0 %v523, 120
    %v526 = vpop.permute.xlu0 %525
    %v528 = vmul.f32 %v514, %v526
    %v529 = vmul.f32 %v515, %v526
    %v530 = vmul.f32 %v516, %v526
    %v531 = vmul.f32 %v517, %v526
    %v532 = vmul.f32 %v518, %v526
    %v533 = vmul.f32 %v519, %v526
    %v534 = vlaneseq
    %v535 = vshrl.u32 %v534, 7
    %v536 = vsub.s32 0, %v535
    %v537 = vrot.slane %v97, %v536
    %539 = vrot.lane.b32.xlu0 %v537, 8
    %v540 = vpop.permute.xlu0 %539
    %v542 = vmul.f32 %v528, %v540
    %v543 = vmul.f32 %v529, %v540
    %v544 = vmul.f32 %v530, %v540
    %v545 = vmul.f32 %v531, %v540
    %v546 = vmul.f32 %v532, %v540
    %v547 = vmul.f32 %v533, %v540
    %v548 = vlaneseq
    %v549 = vshrl.u32 %v548, 7
    %v550 = vsub.s32 0, %v549
    %v551 = vrot.slane %v98, %v550
    %553 = vrot.lane.b32.xlu0 %v551, 8
    %v554 = vpop.permute.xlu0 %553
    %v556 = vadd.f32 %v542, %v554
    %v557 = vadd.f32 %v543, %v554
    %v558 = vadd.f32 %v544, %v554
    %v559 = vadd.f32 %v545, %v554
    %v560 = vadd.f32 %v546, %v554
    %v561 = vadd.f32 %v547, %v554
    %v562 = vmax.f32 %v556, 0.0
    %v563 = vmax.f32 %v557, 0.0
    %v564 = vmax.f32 %v558, 0.0
    %v565 = vmax.f32 %v559, 0.0
    %v566 = vmax.f32 %v560, 0.0
    %v567 = vmax.f32 %v561, 0.0
    %v568 = vmul.f32 %v562, %v389
    %v569 = vmul.f32 %v563, %v394
    %v570 = vmul.f32 %v564, %v399
    %v571 = vmul.f32 %v565, %v404
    %v572 = vmul.f32 %v566, %v409
    %v573 = vmul.f32 %v567, %v414
    %v574 = vlaneseq
    %v575 = vshrl.u32 %v574, 7
    %v576 = vsub.s32 0, %v575
    %v577 = vrot.slane %v99, %v576
    %v578 = vadd.f32 %v577, 0.0
    %585 = vrot.lane.b32.xlu0 %v568, 120
    %v586 = vpop.permute.xlu0 %585
    %587 = vrot.lane.b32.xlu0 %v569, 120
    %v588 = vpop.permute.xlu0 %587
    %589 = vrot.lane.b32.xlu0 %v570, 120
    %v590 = vpop.permute.xlu0 %589
    %591 = vrot.lane.b32.xlu0 %v571, 120
    %v592 = vpop.permute.xlu0 %591
    %593 = vrot.lane.b32.xlu0 %v572, 120
    %v594 = vpop.permute.xlu0 %593
    %595 = vrot.lane.b32.xlu0 %v573, 120
    %v596 = vpop.permute.xlu0 %595
    %v603 = vrot.slane %v586, 6
    %v604 = vrot.slane %v588, 6
    %v605 = vrot.slane %v590, 6
    %v606 = vrot.slane %v592, 6
    %v607 = vrot.slane %v594, 6
    %v608 = vrot.slane %v596, 6
    %vm609 = vcmp.lt.s32.totalorder %v114, 2
    %v610 = vsel %vm609, %v607, %v608
    %v611 = vsel %vm609, %v606, %v607
    %v612 = vsel %vm609, %v605, %v606
    %v613 = vsel %vm609, %v604, %v605
    %v614 = vsel %vm609, %v603, %v604
    %v615 = vsel %vm609, %v608, %v603
    %v616 = vpack.c.bf16 %v614, %v615
    %v617 = vpack.c.bf16 %v612, %v613
    %v618 = vpack.c.bf16 %v610, %v611
    %v619 = vld [vmem:[%s3] sm:$0xf]
    %v620 = vld [vmem:[%s3 + $0x4] sm:$0xf]
    %v623 = vunpack.c.l.b16 %v619
    %v624 = vunpack.c.l.b16 %v620
    %v625 = vpack.c.b16 %v624, %v623
    %v628 = vsel %vm38, %v616, 0
    %v631 = vsel %vm38, %v617, 0
    %v634 = vsel %vm38, %v618, 0
    %636 = vmatprep.subr.bf16.mxu0 0
    %637 = vmatpush1.bf16.msra.mxu0 0
    %638 = vmatprep.subr.bf16.mxu0 0
    %639 = vmatpush1.bf16.msra.mxu0 0
    %640 = vmatprep.subr.bf16.mxu0 0
    %641 = vmatpush1.bf16.msra.mxu0 0
    %642 = vmatprep.subr.bf16.mxu0 0
    %643 = vmatpush1.bf16.msra.mxu0 0
    %644 = vmatprep.subr.bf16.mxu0 0
    %645 = vmatpush1.bf16.msra.mxu0 0
    %646 = vmatprep.subr.bf16.mxu0 0
    %647 = vmatpush1.bf16.msra.mxu0 0
    %648 = vmatprep.subr.bf16.mxu0 0
    %649 = vmatpush1.bf16.msra.mxu0 0
    %650 = vmatprep.subr.bf16.mxu0 0
    %651 = vmatpush1.bf16.msra.mxu0 %v625
    %652 = vmatprep.subr.bf16.mxu0 0
    %653 = vmatpush2.bf16.msra.mxu0 0
    %654 = vmatprep.subr.bf16.mxu0 0
    %655 = vmatpush2.bf16.msra.mxu0 0
    %656 = vmatprep.subr.bf16.mxu0 0
    %657 = vmatpush2.bf16.msra.mxu0 0
    %658 = vmatprep.subr.bf16.mxu0 0
    %659 = vmatpush2.bf16.msra.mxu0 0
    %660 = vmatprep.subr.bf16.mxu0 0
    %661 = vmatpush2.bf16.msra.mxu0 0
    %662 = vmatprep.subr.bf16.mxu0 0
    %663 = vmatpush2.bf16.msra.mxu0 0
    %664 = vmatprep.subr.bf16.mxu0 0
    %665 = vmatpush2.bf16.msra.mxu0 0
    %666 = vmatprep.subr.bf16.mxu0 0
    %667 = vmatpush2.bf16.msra.mxu0 0
    %668 = vmatprep.mubr.bf16.mxu0 0
    %669 = vmatmul.mubr.bf16.gmra.mxu0 %v628
    %v670 = vpop.f32.mrf.mxu0
    %v671 = vadd.f32 0.0, %v670
    %v672 = vpop.f32.mrf.mxu0
    %v673 = vpop.f32.mrf.mxu0
    %v674 = vadd.f32 0.0, %v673
    %v675 = vpop.f32.mrf.mxu0
    %676 = vmatprep.mubr.bf16.mxu0 0
    %677 = vmatmul.mubr.bf16.gmra.mxu0 %v631
    %v678 = vpop.f32.mrf.mxu0
    %v679 = vadd.f32 0.0, %v678
    %v680 = vpop.f32.mrf.mxu0
    %v681 = vpop.f32.mrf.mxu0
    %v682 = vadd.f32 0.0, %v681
    %v683 = vpop.f32.mrf.mxu0
    %684 = vmatprep.mubr.bf16.mxu0 0
    %685 = vmatmul.mubr.bf16.gmra.mxu0 %v634
    %v686 = vpop.f32.mrf.mxu0
    %v687 = vadd.f32 0.0, %v686
    %v688 = vpop.f32.mrf.mxu0
    %v689 = vpop.f32.mrf.mxu0
    %v690 = vadd.f32 0.0, %v689
    %v691 = vpop.f32.mrf.mxu0
    %692 = vdwg.mxu0
    %v693 = vadd.f32 %v578, %v671
    %v694 = vadd.f32 %v578, %v674
    %v695 = vadd.f32 %v578, %v679
    %v696 = vadd.f32 %v578, %v682
    %v697 = vadd.f32 %v578, %v687
    %v698 = vadd.f32 %v578, %v690
    %v699 = vrot.slane %v586, 7
    %v700 = vrot.slane %v588, 7
    %v701 = vrot.slane %v590, 7
    %v702 = vrot.slane %v592, 7
    %v703 = vrot.slane %v594, 7
    %v704 = vrot.slane %v596, 7
    %v705 = vsel %vm115, %v703, %v704
    %v706 = vsel %vm115, %v702, %v703
    %v707 = vsel %vm115, %v701, %v702
    %v708 = vsel %vm115, %v700, %v701
    %v709 = vsel %vm115, %v699, %v700
    %v710 = vsel %vm115, %v704, %v699
    %v711 = vpack.c.bf16 %v709, %v710
    %v712 = vpack.c.bf16 %v707, %v708
    %v713 = vpack.c.bf16 %v705, %v706
    %s714 = scalar_lea.vmem %s3, 8
    %v715 = vld [vmem:[%s714] sm:$0xf]
    %v716 = vld [vmem:[%s714 + $0x4] sm:$0xf]
    %v719 = vunpack.c.l.b16 %v715
    %v720 = vunpack.c.l.b16 %v716
    %v721 = vpack.c.b16 %v720, %v719
    %v724 = vsel %vm38, %v711, 0
    %v727 = vsel %vm38, %v712, 0
    %v730 = vsel %vm38, %v713, 0
    %732 = vmatprep.subr.bf16.mxu0 0
    %733 = vmatpush1.bf16.msra.mxu0 0
    %734 = vmatprep.subr.bf16.mxu0 0
    %735 = vmatpush1.bf16.msra.mxu0 0
    %736 = vmatprep.subr.bf16.mxu0 0
    %737 = vmatpush1.bf16.msra.mxu0 0
    %738 = vmatprep.subr.bf16.mxu0 0
    %739 = vmatpush1.bf16.msra.mxu0 0
    %740 = vmatprep.subr.bf16.mxu0 0
    %741 = vmatpush1.bf16.msra.mxu0 0
    %742 = vmatprep.subr.bf16.mxu0 0
    %743 = vmatpush1.bf16.msra.mxu0 0
    %744 = vmatprep.subr.bf16.mxu0 0
    %745 = vmatpush1.bf16.msra.mxu0 0
    %746 = vmatprep.subr.bf16.mxu0 0
    %747 = vmatpush1.bf16.msra.mxu0 %v721
    %748 = vmatprep.subr.bf16.mxu0 0
    %749 = vmatpush2.bf16.msra.mxu0 0
    %750 = vmatprep.subr.bf16.mxu0 0
    %751 = vmatpush2.bf16.msra.mxu0 0
    %752 = vmatprep.subr.bf16.mxu0 0
    %753 = vmatpush2.bf16.msra.mxu0 0
    %754 = vmatprep.subr.bf16.mxu0 0
    %755 = vmatpush2.bf16.msra.mxu0 0
    %756 = vmatprep.subr.bf16.mxu0 0
    %757 = vmatpush2.bf16.msra.mxu0 0
    %758 = vmatprep.subr.bf16.mxu0 0
    %759 = vmatpush2.bf16.msra.mxu0 0
    %760 = vmatprep.subr.bf16.mxu0 0
    %761 = vmatpush2.bf16.msra.mxu0 0
    %762 = vmatprep.subr.bf16.mxu0 0
    %763 = vmatpush2.bf16.msra.mxu0 0
    %764 = vmatprep.mubr.bf16.mxu0 0
    %765 = vmatmul.mubr.bf16.gmra.mxu0 %v724
    %v766 = vpop.f32.mrf.mxu0
    %v767 = vadd.f32 0.0, %v766
    %v768 = vpop.f32.mrf.mxu0
    %v769 = vpop.f32.mrf.mxu0
    %v770 = vadd.f32 0.0, %v769
    %v771 = vpop.f32.mrf.mxu0
    %772 = vmatprep.mubr.bf16.mxu0 0
    %773 = vmatmul.mubr.bf16.gmra.mxu0 %v727
    %v774 = vpop.f32.mrf.mxu0
    %v775 = vadd.f32 0.0, %v774
    %v776 = vpop.f32.mrf.mxu0
    %v777 = vpop.f32.mrf.mxu0
    %v778 = vadd.f32 0.0, %v777
    %v779 = vpop.f32.mrf.mxu0
    %780 = vmatprep.mubr.bf16.mxu0 0
    %781 = vmatmul.mubr.bf16.gmra.mxu0 %v730
    %v782 = vpop.f32.mrf.mxu0
    %v783 = vadd.f32 0.0, %v782
    %v784 = vpop.f32.mrf.mxu0
    %v785 = vpop.f32.mrf.mxu0
    %v786 = vadd.f32 0.0, %v785
    %v787 = vpop.f32.mrf.mxu0
    %788 = vdwg.mxu0
    %v789 = vadd.f32 %v693, %v767
    %v790 = vadd.f32 %v694, %v770
    %v791 = vadd.f32 %v695, %v775
    %v792 = vadd.f32 %v696, %v778
    %v793 = vadd.f32 %v697, %v783
    %v794 = vadd.f32 %v698, %v786
    %v795 = vpack.c.bf16 %v569, %v568
    %v796 = vpack.c.bf16 %v571, %v570
    %v797 = vpack.c.bf16 %v573, %v572
    %s798 = scalar_lea.vmem %s3, 16
    %v799 = vld [vmem:[%s798] sm:$0xf]
    %v800 = vld [vmem:[%s798 + $0x4] sm:$0xf]
    %804 = vrot.lane.b32.xlu0 %v795, 120
    %v805 = vpop.permute.xlu0 %804
    %806 = vrot.lane.b32.xlu0 %v796, 120
    %v807 = vpop.permute.xlu0 %806
    %808 = vrot.lane.b32.xlu0 %v797, 120
    %v809 = vpop.permute.xlu0 %808
    %v812 = vunpack.c.l.b16 %v799
    %v813 = vunpack.c.l.b16 %v800
    %v814 = vpack.c.b16 %v813, %v812
    %v817 = vsel %vm38, %v805, 0
    %v820 = vsel %vm38, %v807, 0
    %v823 = vsel %vm38, %v809, 0
    %825 = vmatprep.subr.bf16.mxu0 0
    %826 = vmatpush1.bf16.msra.mxu0 0
    %827 = vmatprep.subr.bf16.mxu0 0
    %828 = vmatpush1.bf16.msra.mxu0 0
    %829 = vmatprep.subr.bf16.mxu0 0
    %830 = vmatpush1.bf16.msra.mxu0 0
    %831 = vmatprep.subr.bf16.mxu0 0
    %832 = vmatpush1.bf16.msra.mxu0 0
    %833 = vmatprep.subr.bf16.mxu0 0
    %834 = vmatpush1.bf16.msra.mxu0 0
    %835 = vmatprep.subr.bf16.mxu0 0
    %836 = vmatpush1.bf16.msra.mxu0 0
    %837 = vmatprep.subr.bf16.mxu0 0
    %838 = vmatpush1.bf16.msra.mxu0 0
    %839 = vmatprep.subr.bf16.mxu0 0
    %840 = vmatpush1.bf16.msra.mxu0 %v814
    %841 = vmatprep.subr.bf16.mxu0 0
    %842 = vmatpush2.bf16.msra.mxu0 0
    %843 = vmatprep.subr.bf16.mxu0 0
    %844 = vmatpush2.bf16.msra.mxu0 0
    %845 = vmatprep.subr.bf16.mxu0 0
    %846 = vmatpush2.bf16.msra.mxu0 0
    %847 = vmatprep.subr.bf16.mxu0 0
    %848 = vmatpush2.bf16.msra.mxu0 0
    %849 = vmatprep.subr.bf16.mxu0 0
    %850 = vmatpush2.bf16.msra.mxu0 0
    %851 = vmatprep.subr.bf16.mxu0 0
    %852 = vmatpush2.bf16.msra.mxu0 0
    %853 = vmatprep.subr.bf16.mxu0 0
    %854 = vmatpush2.bf16.msra.mxu0 0
    %855 = vmatprep.subr.bf16.mxu0 0
    %856 = vmatpush2.bf16.msra.mxu0 0
    %857 = vmatprep.mubr.bf16.mxu0 0
    %858 = vmatmul.mubr.bf16.gmra.mxu0 %v817
    %v859 = vpop.f32.mrf.mxu0
    %v860 = vadd.f32 0.0, %v859
    %v861 = vpop.f32.mrf.mxu0
    %v862 = vpop.f32.mrf.mxu0
    %v863 = vadd.f32 0.0, %v862
    %v864 = vpop.f32.mrf.mxu0
    %865 = vmatprep.mubr.bf16.mxu0 0
    %866 = vmatmul.mubr.bf16.gmra.mxu0 %v820
    %v867 = vpop.f32.mrf.mxu0
    %v868 = vadd.f32 0.0, %v867
    %v869 = vpop.f32.mrf.mxu0
    %v870 = vpop.f32.mrf.mxu0
    %v871 = vadd.f32 0.0, %v870
    %v872 = vpop.f32.mrf.mxu0
    %873 = vmatprep.mubr.bf16.mxu0 0
    %874 = vmatmul.mubr.bf16.gmra.mxu0 %v823
    %v875 = vpop.f32.mrf.mxu0
    %v876 = vadd.f32 0.0, %v875
    %v877 = vpop.f32.mrf.mxu0
    %v878 = vpop.f32.mrf.mxu0
    %v879 = vadd.f32 0.0, %v878
    %v880 = vpop.f32.mrf.mxu0
    %881 = vdwg.mxu0
    %v882 = vadd.f32 %v789, %v860
    %v883 = vadd.f32 %v790, %v863
    %v884 = vadd.f32 %v791, %v868
    %v885 = vadd.f32 %v792, %v871
    %v886 = vadd.f32 %v793, %v876
    %v887 = vadd.f32 %v794, %v879
    %v888 = vrot.slane %v586, 1
    %v889 = vrot.slane %v588, 1
    %v890 = vrot.slane %v590, 1
    %v891 = vrot.slane %v592, 1
    %v892 = vrot.slane %v594, 1
    %v893 = vrot.slane %v596, 1
    %v894 = vsel %vm295, %v892, %v893
    %v895 = vsel %vm295, %v891, %v892
    %v896 = vsel %vm295, %v890, %v891
    %v897 = vsel %vm295, %v889, %v890
    %v898 = vsel %vm295, %v888, %v889
    %v899 = vsel %vm295, %v893, %v888
    %v900 = vpack.c.bf16 %v897, %v898
    %v901 = vpack.c.bf16 %v895, %v896
    %v902 = vpack.c.bf16 %v899, %v894
    %s903 = scalar_lea.vmem %s3, 24
    %v904 = vld [vmem:[%s903] sm:$0xf]
    %v905 = vld [vmem:[%s903 + $0x4] sm:$0xf]
    %v908 = vunpack.c.l.b16 %v904
    %v909 = vunpack.c.l.b16 %v905
    %v910 = vpack.c.b16 %v909, %v908
    %v913 = vsel %vm38, %v900, 0
    %v916 = vsel %vm38, %v901, 0
    %v919 = vsel %vm38, %v902, 0
    %921 = vmatprep.subr.bf16.mxu0 0
    %922 = vmatpush1.bf16.msra.mxu0 0
    %923 = vmatprep.subr.bf16.mxu0 0
    %924 = vmatpush1.bf16.msra.mxu0 0
    %925 = vmatprep.subr.bf16.mxu0 0
    %926 = vmatpush1.bf16.msra.mxu0 0
    %927 = vmatprep.subr.bf16.mxu0 0
    %928 = vmatpush1.bf16.msra.mxu0 0
    %929 = vmatprep.subr.bf16.mxu0 0
    %930 = vmatpush1.bf16.msra.mxu0 0
    %931 = vmatprep.subr.bf16.mxu0 0
    %932 = vmatpush1.bf16.msra.mxu0 0
    %933 = vmatprep.subr.bf16.mxu0 0
    %934 = vmatpush1.bf16.msra.mxu0 0
    %935 = vmatprep.subr.bf16.mxu0 0
    %936 = vmatpush1.bf16.msra.mxu0 %v910
    %937 = vmatprep.subr.bf16.mxu0 0
    %938 = vmatpush2.bf16.msra.mxu0 0
    %939 = vmatprep.subr.bf16.mxu0 0
    %940 = vmatpush2.bf16.msra.mxu0 0
    %941 = vmatprep.subr.bf16.mxu0 0
    %942 = vmatpush2.bf16.msra.mxu0 0
    %943 = vmatprep.subr.bf16.mxu0 0
    %944 = vmatpush2.bf16.msra.mxu0 0
    %945 = vmatprep.subr.bf16.mxu0 0
    %946 = vmatpush2.bf16.msra.mxu0 0
    %947 = vmatprep.subr.bf16.mxu0 0
    %948 = vmatpush2.bf16.msra.mxu0 0
    %949 = vmatprep.subr.bf16.mxu0 0
    %950 = vmatpush2.bf16.msra.mxu0 0
    %951 = vmatprep.subr.bf16.mxu0 0
    %952 = vmatpush2.bf16.msra.mxu0 0
    %953 = vmatprep.mubr.bf16.mxu0 0
    %954 = vmatmul.mubr.bf16.gmra.mxu0 %v913
    %v955 = vpop.f32.mrf.mxu0
    %v956 = vadd.f32 0.0, %v955
    %v957 = vpop.f32.mrf.mxu0
    %v958 = vpop.f32.mrf.mxu0
    %v959 = vadd.f32 0.0, %v958
    %v960 = vpop.f32.mrf.mxu0
    %961 = vmatprep.mubr.bf16.mxu0 0
    %962 = vmatmul.mubr.bf16.gmra.mxu0 %v916
    %v963 = vpop.f32.mrf.mxu0
    %v964 = vadd.f32 0.0, %v963
    %v965 = vpop.f32.mrf.mxu0
    %v966 = vpop.f32.mrf.mxu0
    %v967 = vadd.f32 0.0, %v966
    %v968 = vpop.f32.mrf.mxu0
    %969 = vmatprep.mubr.bf16.mxu0 0
    %970 = vmatmul.mubr.bf16.gmra.mxu0 %v919
    %v971 = vpop.f32.mrf.mxu0
    %v972 = vadd.f32 0.0, %v971
    %v973 = vpop.f32.mrf.mxu0
    %v974 = vpop.f32.mrf.mxu0
    %v975 = vadd.f32 0.0, %v974
    %v976 = vpop.f32.mrf.mxu0
    %977 = vdwg.mxu0
    %v978 = vadd.f32 %v882, %v956
    %v979 = vadd.f32 %v883, %v959
    %v980 = vadd.f32 %v884, %v964
    %v981 = vadd.f32 %v885, %v967
    %v982 = vadd.f32 %v886, %v972
    %v983 = vadd.f32 %v887, %v975
    %v984 = vrot.slane %v586, 2
    %v985 = vrot.slane %v588, 2
    %v986 = vrot.slane %v590, 2
    %v987 = vrot.slane %v592, 2
    %v988 = vrot.slane %v594, 2
    %v989 = vrot.slane %v596, 2
    %vm990 = vcmp.lt.s32.totalorder %v114, 6
    %v991 = vsel %vm990, %v988, %v989
    %v992 = vsel %vm990, %v987, %v988
    %v993 = vsel %vm990, %v986, %v987
    %v994 = vsel %vm990, %v985, %v986
    %v995 = vsel %vm990, %v984, %v985
    %v996 = vsel %vm990, %v989, %v984
    %v997 = vpack.c.bf16 %v994, %v995
    %v998 = vpack.c.bf16 %v992, %v993
    %v999 = vpack.c.bf16 %v996, %v991
    %s1000 = scalar_lea.vmem %s3, 32
    %v1001 = vld [vmem:[%s1000] sm:$0xf]
    %v1002 = vld [vmem:[%s1000 + $0x4] sm:$0xf]
    %v1005 = vunpack.c.l.b16 %v1001
    %v1006 = vunpack.c.l.b16 %v1002
    %v1007 = vpack.c.b16 %v1006, %v1005
    %v1010 = vsel %vm38, %v997, 0
    %v1013 = vsel %vm38, %v998, 0
    %v1016 = vsel %vm38, %v999, 0
    %1018 = vmatprep.subr.bf16.mxu0 0
    %1019 = vmatpush1.bf16.msra.mxu0 0
    %1020 = vmatprep.subr.bf16.mxu0 0
    %1021 = vmatpush1.bf16.msra.mxu0 0
    %1022 = vmatprep.subr.bf16.mxu0 0
    %1023 = vmatpush1.bf16.msra.mxu0 0
    %1024 = vmatprep.subr.bf16.mxu0 0
    %1025 = vmatpush1.bf16.msra.mxu0 0
    %1026 = vmatprep.subr.bf16.mxu0 0
    %1027 = vmatpush1.bf16.msra.mxu0 0
    %1028 = vmatprep.subr.bf16.mxu0 0
    %1029 = vmatpush1.bf16.msra.mxu0 0
    %1030 = vmatprep.subr.bf16.mxu0 0
    %1031 = vmatpush1.bf16.msra.mxu0 0
    %1032 = vmatprep.subr.bf16.mxu0 0
    %1033 = vmatpush1.bf16.msra.mxu0 %v1007
    %1034 = vmatprep.subr.bf16.mxu0 0
    %1035 = vmatpush2.bf16.msra.mxu0 0
    %1036 = vmatprep.subr.bf16.mxu0 0
    %1037 = vmatpush2.bf16.msra.mxu0 0
    %1038 = vmatprep.subr.bf16.mxu0 0
    %1039 = vmatpush2.bf16.msra.mxu0 0
    %1040 = vmatprep.subr.bf16.mxu0 0
    %1041 = vmatpush2.bf16.msra.mxu0 0
    %1042 = vmatprep.subr.bf16.mxu0 0
    %1043 = vmatpush2.bf16.msra.mxu0 0
    %1044 = vmatprep.subr.bf16.mxu0 0
    %1045 = vmatpush2.bf16.msra.mxu0 0
    %1046 = vmatprep.subr.bf16.mxu0 0
    %1047 = vmatpush2.bf16.msra.mxu0 0
    %1048 = vmatprep.subr.bf16.mxu0 0
    %1049 = vmatpush2.bf16.msra.mxu0 0
    %1050 = vmatprep.mubr.bf16.mxu0 0
    %1051 = vmatmul.mubr.bf16.gmra.mxu0 %v1010
    %v1052 = vpop.f32.mrf.mxu0
    %v1053 = vadd.f32 0.0, %v1052
    %v1054 = vpop.f32.mrf.mxu0
    %v1055 = vpop.f32.mrf.mxu0
    %v1056 = vadd.f32 0.0, %v1055
    %v1057 = vpop.f32.mrf.mxu0
    %1058 = vmatprep.mubr.bf16.mxu0 0
    %1059 = vmatmul.mubr.bf16.gmra.mxu0 %v1013
    %v1060 = vpop.f32.mrf.mxu0
    %v1061 = vadd.f32 0.0, %v1060
    %v1062 = vpop.f32.mrf.mxu0
    %v1063 = vpop.f32.mrf.mxu0
    %v1064 = vadd.f32 0.0, %v1063
    %v1065 = vpop.f32.mrf.mxu0
    %1066 = vmatprep.mubr.bf16.mxu0 0
    %1067 = vmatmul.mubr.bf16.gmra.mxu0 %v1016
    %v1068 = vpop.f32.mrf.mxu0
    %v1069 = vadd.f32 0.0, %v1068
    %v1070 = vpop.f32.mrf.mxu0
    %v1071 = vpop.f32.mrf.mxu0
    %v1072 = vadd.f32 0.0, %v1071
    %v1073 = vpop.f32.mrf.mxu0
    %1074 = vdwg.mxu0
    %v1075 = vadd.f32 %v978, %v1053
    %v1076 = vadd.f32 %v979, %v1056
    %v1077 = vadd.f32 %v980, %v1061
    %v1078 = vadd.f32 %v981, %v1064
    %v1079 = vadd.f32 %v982, %v1069
    %v1080 = vadd.f32 %v983, %v1072
    %v1081 = vmul.f32 %v380, %v95
    %v1082 = vmul.f32 %v381, %v95
    %v1083 = vmul.f32 %v382, %v95
    %v1084 = vmul.f32 %v383, %v95
    %v1085 = vmul.f32 %v384, %v95
    %v1086 = vmul.f32 %v385, %v95
    %v1087 = vadd.f32 %v1081, %v1075
    %v1088 = vadd.f32 %v1082, %v1076
    %v1089 = vadd.f32 %v1083, %v1077
    %v1090 = vadd.f32 %v1084, %v1078
    %v1091 = vadd.f32 %v1085, %v1079
    %v1092 = vadd.f32 %v1086, %v1080
    %v1093 = vmul.f32 %v1087, %v389
    %v1094 = vmul.f32 %v1088, %v394
    %v1095 = vmul.f32 %v1089, %v399
    %v1096 = vmul.f32 %v1090, %v404
    %v1097 = vmul.f32 %v1091, %v409
    %v1098 = vmul.f32 %v1092, %v414
    %v1099 = vmul.f32 %v1093, %v1093
    %v1100 = vmul.f32 %v1094, %v1094
    %v1101 = vmul.f32 %v1095, %v1095
    %v1102 = vmul.f32 %v1096, %v1096
    %v1103 = vmul.f32 %v1097, %v1097
    %v1104 = vmul.f32 %v1098, %v1098
    %1111 = vrot.lane.b32.xlu0 %v1099, 32
    %v1112 = vpop.permute.xlu0 %1111
    %1113 = vrot.lane.b32.xlu0 %v1100, 32
    %v1114 = vpop.permute.xlu0 %1113
    %1115 = vrot.lane.b32.xlu0 %v1101, 32
    %v1116 = vpop.permute.xlu0 %1115
    %1117 = vrot.lane.b32.xlu0 %v1102, 32
    %v1118 = vpop.permute.xlu0 %1117
    %1119 = vrot.lane.b32.xlu0 %v1103, 32
    %v1120 = vpop.permute.xlu0 %1119
    %1121 = vrot.lane.b32.xlu0 %v1104, 32
    %v1122 = vpop.permute.xlu0 %1121
    %v1129 = vsel %vm482, %v1093, %v1112
    %v1130 = vsel %vm482, %v1094, %v1114
    %v1131 = vsel %vm482, %v1095, %v1116
    %v1132 = vsel %vm482, %v1096, %v1118
    %v1133 = vsel %vm482, %v1097, %v1120
    %v1134 = vsel %vm482, %v1098, %v1122
    %vm1135 = vcmask 523264
    %v1136 = vsel %vm1135, %v1129, 0.0
    %v1137 = vsel %vm1135, %v1130, 0.0
    %v1138 = vadd.f32 %v1136, %v1137
    %v1139 = vsel %vm1135, %v1131, 0.0
    %v1140 = vadd.f32 %v1138, %v1139
    %v1141 = vsel %vm1135, %v1132, 0.0
    %v1142 = vadd.f32 %v1140, %v1141
    %v1143 = vsel %vm1135, %v1133, 0.0
    %v1144 = vadd.f32 %v1142, %v1143
    %v1145 = vsel %vm1135, %v1134, 0.0
    %v1146 = vadd.f32 %v1144, %v1145
    %v1147 = vrot.slane %v1146, 4
    %v1148 = vadd.f32 %v1146, %v1147
    %v1149 = vrot.slane %v1148, 2
    %v1150 = vadd.f32 %v1148, %v1149
    %v1151 = vrot.slane %v1150, 1
    %v1152 = vadd.f32 %v1150, %v1151
    %v1153 = vmul.f32 %v1152, 0.03125
    %v1154 = vmul.f32 %v1153, %v1153
    %1156 = vrot.lane.b32.xlu0 %v1154, 32
    %v1157 = vpop.permute.xlu0 %1156
    %v1159 = vsub.f32 %v1153, %v1157
    %v1160 = vmax.f32 %v1159, 0.0
    %v1161 = vadd.f32 %v1160, 1e-05
    %v1162 = vrsqrt.pop %v1161
    %v1163 = vsub.f32 %v1093, %v1153
    %v1164 = vsub.f32 %v1094, %v1153
    %v1165 = vsub.f32 %v1095, %v1153
    %v1166 = vsub.f32 %v1096, %v1153
    %v1167 = vsub.f32 %v1097, %v1153
    %v1168 = vsub.f32 %v1098, %v1153
    %v1169 = vlaneseq
    %v1170 = vshrl.u32 %v1169, 7
    %v1171 = vsub.s32 0, %v1170
    %v1172 = vrot.slane %v1162, %v1171
    %1174 = vrot.lane.b32.xlu0 %v1172, 96
    %v1175 = vpop.permute.xlu0 %1174
    %v1177 = vmul.f32 %v1163, %v1175
    %v1178 = vmul.f32 %v1164, %v1175
    %v1179 = vmul.f32 %v1165, %v1175
    %v1180 = vmul.f32 %v1166, %v1175
    %v1181 = vmul.f32 %v1167, %v1175
    %v1182 = vmul.f32 %v1168, %v1175
    %v1183 = vlaneseq
    %v1184 = vshrl.u32 %v1183, 7
    %v1185 = vsub.s32 0, %v1184
    %v1186 = vrot.slane %v100, %v1185
    %v1187 = vmul.f32 %v1177, %v1186
    %v1188 = vmul.f32 %v1178, %v1186
    %v1189 = vmul.f32 %v1179, %v1186
    %v1190 = vmul.f32 %v1180, %v1186
    %v1191 = vmul.f32 %v1181, %v1186
    %v1192 = vmul.f32 %v1182, %v1186
    %v1193 = vlaneseq
    %v1194 = vshrl.u32 %v1193, 7
    %v1195 = vsub.s32 0, %v1194
    %v1196 = vrot.slane %v101, %v1195
    %v1197 = vadd.f32 %v1187, %v1196
    %v1198 = vadd.f32 %v1188, %v1196
    %v1199 = vadd.f32 %v1189, %v1196
    %v1200 = vadd.f32 %v1190, %v1196
    %v1201 = vadd.f32 %v1191, %v1196
    %v1202 = vadd.f32 %v1192, %v1196
    %v1203 = vmax.f32 %v1197, 0.0
    %v1204 = vmax.f32 %v1198, 0.0
    %v1205 = vmax.f32 %v1199, 0.0
    %v1206 = vmax.f32 %v1200, 0.0
    %v1207 = vmax.f32 %v1201, 0.0
    %v1208 = vmax.f32 %v1202, 0.0
    %v1209 = vmul.f32 %v1203, %v389
    %v1210 = vmul.f32 %v1204, %v394
    %v1211 = vmul.f32 %v1205, %v399
    %v1212 = vmul.f32 %v1206, %v404
    %v1213 = vmul.f32 %v1207, %v409
    %v1214 = vmul.f32 %v1208, %v414
    %v1215 = vld [vmem:[%s8 + $0x6] sm:$0x1]
    %v1216 = vld [vmem:[%s8 + $0x7] sm:$0x1]
    %v1217 = vld [vmem:[%s8 + $0x8] sm:$0x1]
    %v1218 = vld [vmem:[%s8 + $0x9] sm:$0x1]
    %v1219 = vld [vmem:[%s8 + $0xa] sm:$0x1]
    %v1220 = vld [vmem:[%s8 + $0xb] sm:$0x1]
    %v1221 = vlaneseq
    %v1222 = vshrl.u32 %v1221, 7
    %v1223 = vsub.s32 0, %v1222
    %v1224 = vrot.slane %v1215, %v1223
    %v1225 = vadd.f32 %v1224, 0.0
    %v1226 = vrot.slane %v1209, 7
    %v1227 = vrot.slane %v1210, 7
    %v1228 = vrot.slane %v1211, 7
    %v1229 = vrot.slane %v1212, 7
    %v1230 = vrot.slane %v1213, 7
    %v1231 = vrot.slane %v1214, 7
    %v1232 = vsel %vm115, %v1230, %v1231
    %v1233 = vsel %vm115, %v1229, %v1230
    %v1234 = vsel %vm115, %v1228, %v1229
    %v1235 = vsel %vm115, %v1227, %v1228
    %v1236 = vsel %vm115, %v1226, %v1227
    %v1237 = vsel %vm115, %v1231, %v1226
    %v1238 = vpack.c.bf16 %v1236, %v1237
    %v1239 = vpack.c.bf16 %v1234, %v1235
    %v1240 = vpack.c.bf16 %v1232, %v1233
    %v1241 = vld [vmem:[%s4] sm:$0xf]
    %v1242 = vld [vmem:[%s4 + $0x4] sm:$0xf]
    %v1243 = vld [vmem:[%s4 + $0x8] sm:$0xf]
    %v1244 = vld [vmem:[%s4 + $0xc] sm:$0xf]
    %v1249 = vunpack.c.l.b16 %v1241
    %v1250 = vunpack.c.l.b16 %v1242
    %v1251 = vunpack.c.l.b16 %v1243
    %v1252 = vunpack.c.l.b16 %v1244
    %v1253 = vpack.c.b16 %v1250, %v1249
    %v1254 = vpack.c.b16 %v1252, %v1251
    %v1258 = vsel %vm482, %v1238, 0
    %v1261 = vsel %vm482, %v1239, 0
    %v1264 = vsel %vm482, %v1240, 0
    %1266 = vmatprep.subr.bf16.mxu0 0
    %1267 = vmatpush1.bf16.msra.mxu0 0
    %1268 = vmatprep.subr.bf16.mxu0 0
    %1269 = vmatpush1.bf16.msra.mxu0 0
    %1270 = vmatprep.subr.bf16.mxu0 0
    %1271 = vmatpush1.bf16.msra.mxu0 0
    %1272 = vmatprep.subr.bf16.mxu0 0
    %1273 = vmatpush1.bf16.msra.mxu0 0
    %1274 = vmatprep.subr.bf16.mxu0 0
    %1275 = vmatpush1.bf16.msra.mxu0 0
    %1276 = vmatprep.subr.bf16.mxu0 0
    %1277 = vmatpush1.bf16.msra.mxu0 0
    %1278 = vmatprep.subr.bf16.mxu0 0
    %1279 = vmatpush1.bf16.msra.mxu0 %v1254
    %1280 = vmatprep.subr.bf16.mxu0 0
    %1281 = vmatpush1.bf16.msra.mxu0 %v1253
    %1282 = vmatprep.subr.bf16.mxu0 0
    %1283 = vmatpush2.bf16.msra.mxu0 0
    %1284 = vmatprep.subr.bf16.mxu0 0
    %1285 = vmatpush2.bf16.msra.mxu0 0
    %1286 = vmatprep.subr.bf16.mxu0 0
    %1287 = vmatpush2.bf16.msra.mxu0 0
    %1288 = vmatprep.subr.bf16.mxu0 0
    %1289 = vmatpush2.bf16.msra.mxu0 0
    %1290 = vmatprep.subr.bf16.mxu0 0
    %1291 = vmatpush2.bf16.msra.mxu0 0
    %1292 = vmatprep.subr.bf16.mxu0 0
    %1293 = vmatpush2.bf16.msra.mxu0 0
    %1294 = vmatprep.subr.bf16.mxu0 0
    %1295 = vmatpush2.bf16.msra.mxu0 0
    %1296 = vmatprep.subr.bf16.mxu0 0
    %1297 = vmatpush2.bf16.msra.mxu0 0
    %1298 = vmatprep.mubr.bf16.mxu0 0
    %1299 = vmatmul.mubr.bf16.gmra.mxu0 %v1258
    %v1300 = vpop.f32.mrf.mxu0
    %v1301 = vadd.f32 0.0, %v1300
    %v1302 = vpop.f32.mrf.mxu0
    %v1303 = vpop.f32.mrf.mxu0
    %v1304 = vadd.f32 0.0, %v1303
    %v1305 = vpop.f32.mrf.mxu0
    %1306 = vmatprep.mubr.bf16.mxu0 0
    %1307 = vmatmul.mubr.bf16.gmra.mxu0 %v1261
    %v1308 = vpop.f32.mrf.mxu0
    %v1309 = vadd.f32 0.0, %v1308
    %v1310 = vpop.f32.mrf.mxu0
    %v1311 = vpop.f32.mrf.mxu0
    %v1312 = vadd.f32 0.0, %v1311
    %v1313 = vpop.f32.mrf.mxu0
    %1314 = vmatprep.mubr.bf16.mxu0 0
    %1315 = vmatmul.mubr.bf16.gmra.mxu0 %v1264
    %v1316 = vpop.f32.mrf.mxu0
    %v1317 = vadd.f32 0.0, %v1316
    %v1318 = vpop.f32.mrf.mxu0
    %v1319 = vpop.f32.mrf.mxu0
    %v1320 = vadd.f32 0.0, %v1319
    %v1321 = vpop.f32.mrf.mxu0
    %1322 = vdwg.mxu0
    %v1323 = vadd.f32 %v1225, %v1301
    %v1324 = vadd.f32 %v1225, %v1304
    %v1325 = vadd.f32 %v1225, %v1309
    %v1326 = vadd.f32 %v1225, %v1312
    %v1327 = vadd.f32 %v1225, %v1317
    %v1328 = vadd.f32 %v1225, %v1320
    %v1329 = vpack.c.bf16 %v1210, %v1209
    %v1330 = vpack.c.bf16 %v1212, %v1211
    %v1331 = vpack.c.bf16 %v1214, %v1213
    %s1332 = scalar_lea.vmem %s4, 16
    %v1333 = vld [vmem:[%s1332] sm:$0xf]
    %v1334 = vld [vmem:[%s1332 + $0x4] sm:$0xf]
    %v1335 = vld [vmem:[%s1332 + $0x8] sm:$0xf]
    %v1336 = vld [vmem:[%s1332 + $0xc] sm:$0xf]
    %v1341 = vunpack.c.l.b16 %v1333
    %v1342 = vunpack.c.l.b16 %v1334
    %v1343 = vunpack.c.l.b16 %v1335
    %v1344 = vunpack.c.l.b16 %v1336
    %v1345 = vpack.c.b16 %v1342, %v1341
    %v1346 = vpack.c.b16 %v1344, %v1343
    %v1350 = vsel %vm482, %v1329, 0
    %v1353 = vsel %vm482, %v1330, 0
    %v1356 = vsel %vm482, %v1331, 0
    %1358 = vmatprep.subr.bf16.mxu0 0
    %1359 = vmatpush1.bf16.msra.mxu0 0
    %1360 = vmatprep.subr.bf16.mxu0 0
    %1361 = vmatpush1.bf16.msra.mxu0 0
    %1362 = vmatprep.subr.bf16.mxu0 0
    %1363 = vmatpush1.bf16.msra.mxu0 0
    %1364 = vmatprep.subr.bf16.mxu0 0
    %1365 = vmatpush1.bf16.msra.mxu0 0
    %1366 = vmatprep.subr.bf16.mxu0 0
    %1367 = vmatpush1.bf16.msra.mxu0 0
    %1368 = vmatprep.subr.bf16.mxu0 0
    %1369 = vmatpush1.bf16.msra.mxu0 0
    %1370 = vmatprep.subr.bf16.mxu0 0
    %1371 = vmatpush1.bf16.msra.mxu0 %v1346
    %1372 = vmatprep.subr.bf16.mxu0 0
    %1373 = vmatpush1.bf16.msra.mxu0 %v1345
    %1374 = vmatprep.subr.bf16.mxu0 0
    %1375 = vmatpush2.bf16.msra.mxu0 0
    %1376 = vmatprep.subr.bf16.mxu0 0
    %1377 = vmatpush2.bf16.msra.mxu0 0
    %1378 = vmatprep.subr.bf16.mxu0 0
    %1379 = vmatpush2.bf16.msra.mxu0 0
    %1380 = vmatprep.subr.bf16.mxu0 0
    %1381 = vmatpush2.bf16.msra.mxu0 0
    %1382 = vmatprep.subr.bf16.mxu0 0
    %1383 = vmatpush2.bf16.msra.mxu0 0
    %1384 = vmatprep.subr.bf16.mxu0 0
    %1385 = vmatpush2.bf16.msra.mxu0 0
    %1386 = vmatprep.subr.bf16.mxu0 0
    %1387 = vmatpush2.bf16.msra.mxu0 0
    %1388 = vmatprep.subr.bf16.mxu0 0
    %1389 = vmatpush2.bf16.msra.mxu0 0
    %1390 = vmatprep.mubr.bf16.mxu0 0
    %1391 = vmatmul.mubr.bf16.gmra.mxu0 %v1350
    %v1392 = vpop.f32.mrf.mxu0
    %v1393 = vadd.f32 0.0, %v1392
    %v1394 = vpop.f32.mrf.mxu0
    %v1395 = vpop.f32.mrf.mxu0
    %v1396 = vadd.f32 0.0, %v1395
    %v1397 = vpop.f32.mrf.mxu0
    %1398 = vmatprep.mubr.bf16.mxu0 0
    %1399 = vmatmul.mubr.bf16.gmra.mxu0 %v1353
    %v1400 = vpop.f32.mrf.mxu0
    %v1401 = vadd.f32 0.0, %v1400
    %v1402 = vpop.f32.mrf.mxu0
    %v1403 = vpop.f32.mrf.mxu0
    %v1404 = vadd.f32 0.0, %v1403
    %v1405 = vpop.f32.mrf.mxu0
    %1406 = vmatprep.mubr.bf16.mxu0 0
    %1407 = vmatmul.mubr.bf16.gmra.mxu0 %v1356
    %v1408 = vpop.f32.mrf.mxu0
    %v1409 = vadd.f32 0.0, %v1408
    %v1410 = vpop.f32.mrf.mxu0
    %v1411 = vpop.f32.mrf.mxu0
    %v1412 = vadd.f32 0.0, %v1411
    %v1413 = vpop.f32.mrf.mxu0
    %1414 = vdwg.mxu0
    %v1415 = vadd.f32 %v1323, %v1393
    %v1416 = vadd.f32 %v1324, %v1396
    %v1417 = vadd.f32 %v1325, %v1401
    %v1418 = vadd.f32 %v1326, %v1404
    %v1419 = vadd.f32 %v1327, %v1409
    %v1420 = vadd.f32 %v1328, %v1412
    %v1421 = vrot.slane %v1209, 1
    %v1422 = vrot.slane %v1210, 1
    %v1423 = vrot.slane %v1211, 1
    %v1424 = vrot.slane %v1212, 1
    %v1425 = vrot.slane %v1213, 1
    %v1426 = vrot.slane %v1214, 1
    %v1427 = vsel %vm295, %v1425, %v1426
    %v1428 = vsel %vm295, %v1424, %v1425
    %v1429 = vsel %vm295, %v1423, %v1424
    %v1430 = vsel %vm295, %v1422, %v1423
    %v1431 = vsel %vm295, %v1421, %v1422
    %v1432 = vsel %vm295, %v1426, %v1421
    %v1433 = vpack.c.bf16 %v1430, %v1431
    %v1434 = vpack.c.bf16 %v1428, %v1429
    %v1435 = vpack.c.bf16 %v1432, %v1427
    %s1436 = scalar_lea.vmem %s4, 32
    %v1437 = vld [vmem:[%s1436] sm:$0xf]
    %v1438 = vld [vmem:[%s1436 + $0x4] sm:$0xf]
    %v1439 = vld [vmem:[%s1436 + $0x8] sm:$0xf]
    %v1440 = vld [vmem:[%s1436 + $0xc] sm:$0xf]
    %v1445 = vunpack.c.l.b16 %v1437
    %v1446 = vunpack.c.l.b16 %v1438
    %v1447 = vunpack.c.l.b16 %v1439
    %v1448 = vunpack.c.l.b16 %v1440
    %v1449 = vpack.c.b16 %v1446, %v1445
    %v1450 = vpack.c.b16 %v1448, %v1447
    %v1454 = vsel %vm482, %v1433, 0
    %v1457 = vsel %vm482, %v1434, 0
    %v1460 = vsel %vm482, %v1435, 0
    %1462 = vmatprep.subr.bf16.mxu0 0
    %1463 = vmatpush1.bf16.msra.mxu0 0
    %1464 = vmatprep.subr.bf16.mxu0 0
    %1465 = vmatpush1.bf16.msra.mxu0 0
    %1466 = vmatprep.subr.bf16.mxu0 0
    %1467 = vmatpush1.bf16.msra.mxu0 0
    %1468 = vmatprep.subr.bf16.mxu0 0
    %1469 = vmatpush1.bf16.msra.mxu0 0
    %1470 = vmatprep.subr.bf16.mxu0 0
    %1471 = vmatpush1.bf16.msra.mxu0 0
    %1472 = vmatprep.subr.bf16.mxu0 0
    %1473 = vmatpush1.bf16.msra.mxu0 0
    %1474 = vmatprep.subr.bf16.mxu0 0
    %1475 = vmatpush1.bf16.msra.mxu0 %v1450
    %1476 = vmatprep.subr.bf16.mxu0 0
    %1477 = vmatpush1.bf16.msra.mxu0 %v1449
    %1478 = vmatprep.subr.bf16.mxu0 0
    %1479 = vmatpush2.bf16.msra.mxu0 0
    %1480 = vmatprep.subr.bf16.mxu0 0
    %1481 = vmatpush2.bf16.msra.mxu0 0
    %1482 = vmatprep.subr.bf16.mxu0 0
    %1483 = vmatpush2.bf16.msra.mxu0 0
    %1484 = vmatprep.subr.bf16.mxu0 0
    %1485 = vmatpush2.bf16.msra.mxu0 0
    %1486 = vmatprep.subr.bf16.mxu0 0
    %1487 = vmatpush2.bf16.msra.mxu0 0
    %1488 = vmatprep.subr.bf16.mxu0 0
    %1489 = vmatpush2.bf16.msra.mxu0 0
    %1490 = vmatprep.subr.bf16.mxu0 0
    %1491 = vmatpush2.bf16.msra.mxu0 0
    %1492 = vmatprep.subr.bf16.mxu0 0
    %1493 = vmatpush2.bf16.msra.mxu0 0
    %1494 = vmatprep.mubr.bf16.mxu0 0
    %1495 = vmatmul.mubr.bf16.gmra.mxu0 %v1454
    %v1496 = vpop.f32.mrf.mxu0
    %v1497 = vadd.f32 0.0, %v1496
    %v1498 = vpop.f32.mrf.mxu0
    %v1499 = vpop.f32.mrf.mxu0
    %v1500 = vadd.f32 0.0, %v1499
    %v1501 = vpop.f32.mrf.mxu0
    %1502 = vmatprep.mubr.bf16.mxu0 0
    %1503 = vmatmul.mubr.bf16.gmra.mxu0 %v1457
    %v1504 = vpop.f32.mrf.mxu0
    %v1505 = vadd.f32 0.0, %v1504
    %v1506 = vpop.f32.mrf.mxu0
    %v1507 = vpop.f32.mrf.mxu0
    %v1508 = vadd.f32 0.0, %v1507
    %v1509 = vpop.f32.mrf.mxu0
    %1510 = vmatprep.mubr.bf16.mxu0 0
    %1511 = vmatmul.mubr.bf16.gmra.mxu0 %v1460
    %v1512 = vpop.f32.mrf.mxu0
    %v1513 = vadd.f32 0.0, %v1512
    %v1514 = vpop.f32.mrf.mxu0
    %v1515 = vpop.f32.mrf.mxu0
    %v1516 = vadd.f32 0.0, %v1515
    %v1517 = vpop.f32.mrf.mxu0
    %1518 = vdwg.mxu0
    %v1519 = vadd.f32 %v1415, %v1497
    %v1520 = vadd.f32 %v1416, %v1500
    %v1521 = vadd.f32 %v1417, %v1505
    %v1522 = vadd.f32 %v1418, %v1508
    %v1523 = vadd.f32 %v1419, %v1513
    %v1524 = vadd.f32 %v1420, %v1516
    %v1525 = vmul.f32 %v1519, %v389
    %v1526 = vmul.f32 %v1520, %v394
    %v1527 = vmul.f32 %v1521, %v399
    %v1528 = vmul.f32 %v1522, %v404
    %v1529 = vmul.f32 %v1523, %v409
    %v1530 = vmul.f32 %v1524, %v414
    %v1531 = vmul.f32 %v1525, %v1525
    %v1532 = vmul.f32 %v1526, %v1526
    %v1533 = vmul.f32 %v1527, %v1527
    %v1534 = vmul.f32 %v1528, %v1528
    %v1535 = vmul.f32 %v1529, %v1529
    %v1536 = vmul.f32 %v1530, %v1530
    %1543 = vrot.lane.b32.xlu0 %v1525, 120
    %v1544 = vpop.permute.xlu0 %1543
    %1545 = vrot.lane.b32.xlu0 %v1526, 120
    %v1546 = vpop.permute.xlu0 %1545
    %1547 = vrot.lane.b32.xlu0 %v1527, 120
    %v1548 = vpop.permute.xlu0 %1547
    %1549 = vrot.lane.b32.xlu0 %v1528, 120
    %v1550 = vpop.permute.xlu0 %1549
    %1551 = vrot.lane.b32.xlu0 %v1529, 120
    %v1552 = vpop.permute.xlu0 %1551
    %1553 = vrot.lane.b32.xlu0 %v1530, 120
    %v1554 = vpop.permute.xlu0 %1553
    %1567 = vrot.lane.b32.xlu0 %v1531, 8
    %v1568 = vpop.permute.xlu0 %1567
    %1569 = vrot.lane.b32.xlu0 %v1532, 8
    %v1570 = vpop.permute.xlu0 %1569
    %1571 = vrot.lane.b32.xlu0 %v1533, 8
    %v1572 = vpop.permute.xlu0 %1571
    %1573 = vrot.lane.b32.xlu0 %v1534, 8
    %v1574 = vpop.permute.xlu0 %1573
    %1575 = vrot.lane.b32.xlu0 %v1535, 8
    %v1576 = vpop.permute.xlu0 %1575
    %1577 = vrot.lane.b32.xlu0 %v1536, 8
    %v1578 = vpop.permute.xlu0 %1577
    %v1585 = vsel %vm38, %v1544, %v1568
    %v1586 = vsel %vm38, %v1546, %v1570
    %v1587 = vsel %vm38, %v1548, %v1572
    %v1588 = vsel %vm38, %v1550, %v1574
    %v1589 = vsel %vm38, %v1552, %v1576
    %v1590 = vsel %vm38, %v1554, %v1578
    %v1591 = vsel %vm482, %v1585, 0.0
    %v1592 = vsel %vm482, %v1586, 0.0
    %v1593 = vadd.f32 %v1591, %v1592
    %v1594 = vsel %vm482, %v1587, 0.0
    %v1595 = vadd.f32 %v1593, %v1594
    %v1596 = vsel %vm482, %v1588, 0.0
    %v1597 = vadd.f32 %v1595, %v1596
    %v1598 = vsel %vm482, %v1589, 0.0
    %v1599 = vadd.f32 %v1597, %v1598
    %v1600 = vsel %vm482, %v1590, 0.0
    %v1601 = vadd.f32 %v1599, %v1600
    %v1602 = vrot.slane %v1601, 4
    %v1603 = vadd.f32 %v1601, %v1602
    %v1604 = vrot.slane %v1603, 2
    %v1605 = vadd.f32 %v1603, %v1604
    %v1606 = vrot.slane %v1605, 1
    %v1607 = vadd.f32 %v1605, %v1606
    %v1608 = vmul.f32 %v1607, 0.03125
    %v1609 = vmul.f32 %v1608, %v1608
    %1611 = vrot.lane.b32.xlu0 %v1609, 16
    %v1612 = vpop.permute.xlu0 %1611
    %v1614 = vsub.f32 %v1608, %v1612
    %v1615 = vmax.f32 %v1614, 0.0
    %v1616 = vadd.f32 %v1615, 1e-05
    %v1617 = vrsqrt.pop %v1616
    %1619 = vrot.lane.b32.xlu0 %v1608, 8
    %v1620 = vpop.permute.xlu0 %1619
    %v1622 = vsub.f32 %v1525, %v1620
    %v1623 = vsub.f32 %v1526, %v1620
    %v1624 = vsub.f32 %v1527, %v1620
    %v1625 = vsub.f32 %v1528, %v1620
    %v1626 = vsub.f32 %v1529, %v1620
    %v1627 = vsub.f32 %v1530, %v1620
    %v1628 = vlaneseq
    %v1629 = vshrl.u32 %v1628, 7
    %v1630 = vsub.s32 0, %v1629
    %v1631 = vrot.slane %v1617, %v1630
    %1633 = vrot.lane.b32.xlu0 %v1631, 120
    %v1634 = vpop.permute.xlu0 %1633
    %v1636 = vmul.f32 %v1622, %v1634
    %v1637 = vmul.f32 %v1623, %v1634
    %v1638 = vmul.f32 %v1624, %v1634
    %v1639 = vmul.f32 %v1625, %v1634
    %v1640 = vmul.f32 %v1626, %v1634
    %v1641 = vmul.f32 %v1627, %v1634
    %v1642 = vlaneseq
    %v1643 = vshrl.u32 %v1642, 7
    %v1644 = vsub.s32 0, %v1643
    %v1645 = vrot.slane %v1216, %v1644
    %1647 = vrot.lane.b32.xlu0 %v1645, 8
    %v1648 = vpop.permute.xlu0 %1647
    %v1650 = vmul.f32 %v1636, %v1648
    %v1651 = vmul.f32 %v1637, %v1648
    %v1652 = vmul.f32 %v1638, %v1648
    %v1653 = vmul.f32 %v1639, %v1648
    %v1654 = vmul.f32 %v1640, %v1648
    %v1655 = vmul.f32 %v1641, %v1648
    %v1656 = vlaneseq
    %v1657 = vshrl.u32 %v1656, 7
    %v1658 = vsub.s32 0, %v1657
    %v1659 = vrot.slane %v1217, %v1658
    %1661 = vrot.lane.b32.xlu0 %v1659, 8
    %v1662 = vpop.permute.xlu0 %1661
    %v1664 = vadd.f32 %v1650, %v1662
    %v1665 = vadd.f32 %v1651, %v1662
    %v1666 = vadd.f32 %v1652, %v1662
    %v1667 = vadd.f32 %v1653, %v1662
    %v1668 = vadd.f32 %v1654, %v1662
    %v1669 = vadd.f32 %v1655, %v1662
    %v1670 = vmax.f32 %v1664, 0.0
    %v1671 = vmax.f32 %v1665, 0.0
    %v1672 = vmax.f32 %v1666, 0.0
    %v1673 = vmax.f32 %v1667, 0.0
    %v1674 = vmax.f32 %v1668, 0.0
    %v1675 = vmax.f32 %v1669, 0.0
    %v1676 = vmul.f32 %v1670, %v389
    %v1677 = vmul.f32 %v1671, %v394
    %v1678 = vmul.f32 %v1672, %v399
    %v1679 = vmul.f32 %v1673, %v404
    %v1680 = vmul.f32 %v1674, %v409
    %v1681 = vmul.f32 %v1675, %v414
    %v1682 = vlaneseq
    %v1683 = vshrl.u32 %v1682, 7
    %v1684 = vsub.s32 0, %v1683
    %v1685 = vrot.slane %v1218, %v1684
    %v1686 = vadd.f32 %v1685, 0.0
    %1693 = vrot.lane.b32.xlu0 %v1676, 120
    %v1694 = vpop.permute.xlu0 %1693
    %1695 = vrot.lane.b32.xlu0 %v1677, 120
    %v1696 = vpop.permute.xlu0 %1695
    %1697 = vrot.lane.b32.xlu0 %v1678, 120
    %v1698 = vpop.permute.xlu0 %1697
    %1699 = vrot.lane.b32.xlu0 %v1679, 120
    %v1700 = vpop.permute.xlu0 %1699
    %1701 = vrot.lane.b32.xlu0 %v1680, 120
    %v1702 = vpop.permute.xlu0 %1701
    %1703 = vrot.lane.b32.xlu0 %v1681, 120
    %v1704 = vpop.permute.xlu0 %1703
    %v1711 = vrot.slane %v1694, 6
    %v1712 = vrot.slane %v1696, 6
    %v1713 = vrot.slane %v1698, 6
    %v1714 = vrot.slane %v1700, 6
    %v1715 = vrot.slane %v1702, 6
    %v1716 = vrot.slane %v1704, 6
    %v1717 = vsel %vm609, %v1715, %v1716
    %v1718 = vsel %vm609, %v1714, %v1715
    %v1719 = vsel %vm609, %v1713, %v1714
    %v1720 = vsel %vm609, %v1712, %v1713
    %v1721 = vsel %vm609, %v1711, %v1712
    %v1722 = vsel %vm609, %v1716, %v1711
    %v1723 = vpack.c.bf16 %v1721, %v1722
    %v1724 = vpack.c.bf16 %v1719, %v1720
    %v1725 = vpack.c.bf16 %v1717, %v1718
    %v1726 = vld [vmem:[%s5] sm:$0xf]
    %v1727 = vld [vmem:[%s5 + $0x4] sm:$0xf]
    %v1730 = vunpack.c.l.b16 %v1726
    %v1731 = vunpack.c.l.b16 %v1727
    %v1732 = vpack.c.b16 %v1731, %v1730
    %v1735 = vsel %vm38, %v1723, 0
    %v1738 = vsel %vm38, %v1724, 0
    %v1741 = vsel %vm38, %v1725, 0
    %1743 = vmatprep.subr.bf16.mxu0 0
    %1744 = vmatpush1.bf16.msra.mxu0 0
    %1745 = vmatprep.subr.bf16.mxu0 0
    %1746 = vmatpush1.bf16.msra.mxu0 0
    %1747 = vmatprep.subr.bf16.mxu0 0
    %1748 = vmatpush1.bf16.msra.mxu0 0
    %1749 = vmatprep.subr.bf16.mxu0 0
    %1750 = vmatpush1.bf16.msra.mxu0 0
    %1751 = vmatprep.subr.bf16.mxu0 0
    %1752 = vmatpush1.bf16.msra.mxu0 0
    %1753 = vmatprep.subr.bf16.mxu0 0
    %1754 = vmatpush1.bf16.msra.mxu0 0
    %1755 = vmatprep.subr.bf16.mxu0 0
    %1756 = vmatpush1.bf16.msra.mxu0 0
    %1757 = vmatprep.subr.bf16.mxu0 0
    %1758 = vmatpush1.bf16.msra.mxu0 %v1732
    %1759 = vmatprep.subr.bf16.mxu0 0
    %1760 = vmatpush2.bf16.msra.mxu0 0
    %1761 = vmatprep.subr.bf16.mxu0 0
    %1762 = vmatpush2.bf16.msra.mxu0 0
    %1763 = vmatprep.subr.bf16.mxu0 0
    %1764 = vmatpush2.bf16.msra.mxu0 0
    %1765 = vmatprep.subr.bf16.mxu0 0
    %1766 = vmatpush2.bf16.msra.mxu0 0
    %1767 = vmatprep.subr.bf16.mxu0 0
    %1768 = vmatpush2.bf16.msra.mxu0 0
    %1769 = vmatprep.subr.bf16.mxu0 0
    %1770 = vmatpush2.bf16.msra.mxu0 0
    %1771 = vmatprep.subr.bf16.mxu0 0
    %1772 = vmatpush2.bf16.msra.mxu0 0
    %1773 = vmatprep.subr.bf16.mxu0 0
    %1774 = vmatpush2.bf16.msra.mxu0 0
    %1775 = vmatprep.mubr.bf16.mxu0 0
    %1776 = vmatmul.mubr.bf16.gmra.mxu0 %v1735
    %v1777 = vpop.f32.mrf.mxu0
    %v1778 = vadd.f32 0.0, %v1777
    %v1779 = vpop.f32.mrf.mxu0
    %v1780 = vpop.f32.mrf.mxu0
    %v1781 = vadd.f32 0.0, %v1780
    %v1782 = vpop.f32.mrf.mxu0
    %1783 = vmatprep.mubr.bf16.mxu0 0
    %1784 = vmatmul.mubr.bf16.gmra.mxu0 %v1738
    %v1785 = vpop.f32.mrf.mxu0
    %v1786 = vadd.f32 0.0, %v1785
    %v1787 = vpop.f32.mrf.mxu0
    %v1788 = vpop.f32.mrf.mxu0
    %v1789 = vadd.f32 0.0, %v1788
    %v1790 = vpop.f32.mrf.mxu0
    %1791 = vmatprep.mubr.bf16.mxu0 0
    %1792 = vmatmul.mubr.bf16.gmra.mxu0 %v1741
    %v1793 = vpop.f32.mrf.mxu0
    %v1794 = vadd.f32 0.0, %v1793
    %v1795 = vpop.f32.mrf.mxu0
    %v1796 = vpop.f32.mrf.mxu0
    %v1797 = vadd.f32 0.0, %v1796
    %v1798 = vpop.f32.mrf.mxu0
    %1799 = vdwg.mxu0
    %v1800 = vadd.f32 %v1686, %v1778
    %v1801 = vadd.f32 %v1686, %v1781
    %v1802 = vadd.f32 %v1686, %v1786
    %v1803 = vadd.f32 %v1686, %v1789
    %v1804 = vadd.f32 %v1686, %v1794
    %v1805 = vadd.f32 %v1686, %v1797
    %v1806 = vrot.slane %v1694, 7
    %v1807 = vrot.slane %v1696, 7
    %v1808 = vrot.slane %v1698, 7
    %v1809 = vrot.slane %v1700, 7
    %v1810 = vrot.slane %v1702, 7
    %v1811 = vrot.slane %v1704, 7
    %v1812 = vsel %vm115, %v1810, %v1811
    %v1813 = vsel %vm115, %v1809, %v1810
    %v1814 = vsel %vm115, %v1808, %v1809
    %v1815 = vsel %vm115, %v1807, %v1808
    %v1816 = vsel %vm115, %v1806, %v1807
    %v1817 = vsel %vm115, %v1811, %v1806
    %v1818 = vpack.c.bf16 %v1816, %v1817
    %v1819 = vpack.c.bf16 %v1814, %v1815
    %v1820 = vpack.c.bf16 %v1812, %v1813
    %s1821 = scalar_lea.vmem %s5, 8
    %v1822 = vld [vmem:[%s1821] sm:$0xf]
    %v1823 = vld [vmem:[%s1821 + $0x4] sm:$0xf]
    %v1826 = vunpack.c.l.b16 %v1822
    %v1827 = vunpack.c.l.b16 %v1823
    %v1828 = vpack.c.b16 %v1827, %v1826
    %v1831 = vsel %vm38, %v1818, 0
    %v1834 = vsel %vm38, %v1819, 0
    %v1837 = vsel %vm38, %v1820, 0
    %1839 = vmatprep.subr.bf16.mxu0 0
    %1840 = vmatpush1.bf16.msra.mxu0 0
    %1841 = vmatprep.subr.bf16.mxu0 0
    %1842 = vmatpush1.bf16.msra.mxu0 0
    %1843 = vmatprep.subr.bf16.mxu0 0
    %1844 = vmatpush1.bf16.msra.mxu0 0
    %1845 = vmatprep.subr.bf16.mxu0 0
    %1846 = vmatpush1.bf16.msra.mxu0 0
    %1847 = vmatprep.subr.bf16.mxu0 0
    %1848 = vmatpush1.bf16.msra.mxu0 0
    %1849 = vmatprep.subr.bf16.mxu0 0
    %1850 = vmatpush1.bf16.msra.mxu0 0
    %1851 = vmatprep.subr.bf16.mxu0 0
    %1852 = vmatpush1.bf16.msra.mxu0 0
    %1853 = vmatprep.subr.bf16.mxu0 0
    %1854 = vmatpush1.bf16.msra.mxu0 %v1828
    %1855 = vmatprep.subr.bf16.mxu0 0
    %1856 = vmatpush2.bf16.msra.mxu0 0
    %1857 = vmatprep.subr.bf16.mxu0 0
    %1858 = vmatpush2.bf16.msra.mxu0 0
    %1859 = vmatprep.subr.bf16.mxu0 0
    %1860 = vmatpush2.bf16.msra.mxu0 0
    %1861 = vmatprep.subr.bf16.mxu0 0
    %1862 = vmatpush2.bf16.msra.mxu0 0
    %1863 = vmatprep.subr.bf16.mxu0 0
    %1864 = vmatpush2.bf16.msra.mxu0 0
    %1865 = vmatprep.subr.bf16.mxu0 0
    %1866 = vmatpush2.bf16.msra.mxu0 0
    %1867 = vmatprep.subr.bf16.mxu0 0
    %1868 = vmatpush2.bf16.msra.mxu0 0
    %1869 = vmatprep.subr.bf16.mxu0 0
    %1870 = vmatpush2.bf16.msra.mxu0 0
    %1871 = vmatprep.mubr.bf16.mxu0 0
    %1872 = vmatmul.mubr.bf16.gmra.mxu0 %v1831
    %v1873 = vpop.f32.mrf.mxu0
    %v1874 = vadd.f32 0.0, %v1873
    %v1875 = vpop.f32.mrf.mxu0
    %v1876 = vpop.f32.mrf.mxu0
    %v1877 = vadd.f32 0.0, %v1876
    %v1878 = vpop.f32.mrf.mxu0
    %1879 = vmatprep.mubr.bf16.mxu0 0
    %1880 = vmatmul.mubr.bf16.gmra.mxu0 %v1834
    %v1881 = vpop.f32.mrf.mxu0
    %v1882 = vadd.f32 0.0, %v1881
    %v1883 = vpop.f32.mrf.mxu0
    %v1884 = vpop.f32.mrf.mxu0
    %v1885 = vadd.f32 0.0, %v1884
    %v1886 = vpop.f32.mrf.mxu0
    %1887 = vmatprep.mubr.bf16.mxu0 0
    %1888 = vmatmul.mubr.bf16.gmra.mxu0 %v1837
    %v1889 = vpop.f32.mrf.mxu0
    %v1890 = vadd.f32 0.0, %v1889
    %v1891 = vpop.f32.mrf.mxu0
    %v1892 = vpop.f32.mrf.mxu0
    %v1893 = vadd.f32 0.0, %v1892
    %v1894 = vpop.f32.mrf.mxu0
    %1895 = vdwg.mxu0
    %v1896 = vadd.f32 %v1800, %v1874
    %v1897 = vadd.f32 %v1801, %v1877
    %v1898 = vadd.f32 %v1802, %v1882
    %v1899 = vadd.f32 %v1803, %v1885
    %v1900 = vadd.f32 %v1804, %v1890
    %v1901 = vadd.f32 %v1805, %v1893
    %v1902 = vpack.c.bf16 %v1677, %v1676
    %v1903 = vpack.c.bf16 %v1679, %v1678
    %v1904 = vpack.c.bf16 %v1681, %v1680
    %s1905 = scalar_lea.vmem %s5, 16
    %v1906 = vld [vmem:[%s1905] sm:$0xf]
    %v1907 = vld [vmem:[%s1905 + $0x4] sm:$0xf]
    %1911 = vrot.lane.b32.xlu0 %v1902, 120
    %v1912 = vpop.permute.xlu0 %1911
    %1913 = vrot.lane.b32.xlu0 %v1903, 120
    %v1914 = vpop.permute.xlu0 %1913
    %1915 = vrot.lane.b32.xlu0 %v1904, 120
    %v1916 = vpop.permute.xlu0 %1915
    %v1919 = vunpack.c.l.b16 %v1906
    %v1920 = vunpack.c.l.b16 %v1907
    %v1921 = vpack.c.b16 %v1920, %v1919
    %v1924 = vsel %vm38, %v1912, 0
    %v1927 = vsel %vm38, %v1914, 0
    %v1930 = vsel %vm38, %v1916, 0
    %1932 = vmatprep.subr.bf16.mxu0 0
    %1933 = vmatpush1.bf16.msra.mxu0 0
    %1934 = vmatprep.subr.bf16.mxu0 0
    %1935 = vmatpush1.bf16.msra.mxu0 0
    %1936 = vmatprep.subr.bf16.mxu0 0
    %1937 = vmatpush1.bf16.msra.mxu0 0
    %1938 = vmatprep.subr.bf16.mxu0 0
    %1939 = vmatpush1.bf16.msra.mxu0 0
    %1940 = vmatprep.subr.bf16.mxu0 0
    %1941 = vmatpush1.bf16.msra.mxu0 0
    %1942 = vmatprep.subr.bf16.mxu0 0
    %1943 = vmatpush1.bf16.msra.mxu0 0
    %1944 = vmatprep.subr.bf16.mxu0 0
    %1945 = vmatpush1.bf16.msra.mxu0 0
    %1946 = vmatprep.subr.bf16.mxu0 0
    %1947 = vmatpush1.bf16.msra.mxu0 %v1921
    %1948 = vmatprep.subr.bf16.mxu0 0
    %1949 = vmatpush2.bf16.msra.mxu0 0
    %1950 = vmatprep.subr.bf16.mxu0 0
    %1951 = vmatpush2.bf16.msra.mxu0 0
    %1952 = vmatprep.subr.bf16.mxu0 0
    %1953 = vmatpush2.bf16.msra.mxu0 0
    %1954 = vmatprep.subr.bf16.mxu0 0
    %1955 = vmatpush2.bf16.msra.mxu0 0
    %1956 = vmatprep.subr.bf16.mxu0 0
    %1957 = vmatpush2.bf16.msra.mxu0 0
    %1958 = vmatprep.subr.bf16.mxu0 0
    %1959 = vmatpush2.bf16.msra.mxu0 0
    %1960 = vmatprep.subr.bf16.mxu0 0
    %1961 = vmatpush2.bf16.msra.mxu0 0
    %1962 = vmatprep.subr.bf16.mxu0 0
    %1963 = vmatpush2.bf16.msra.mxu0 0
    %1964 = vmatprep.mubr.bf16.mxu0 0
    %1965 = vmatmul.mubr.bf16.gmra.mxu0 %v1924
    %v1966 = vpop.f32.mrf.mxu0
    %v1967 = vadd.f32 0.0, %v1966
    %v1968 = vpop.f32.mrf.mxu0
    %v1969 = vpop.f32.mrf.mxu0
    %v1970 = vadd.f32 0.0, %v1969
    %v1971 = vpop.f32.mrf.mxu0
    %1972 = vmatprep.mubr.bf16.mxu0 0
    %1973 = vmatmul.mubr.bf16.gmra.mxu0 %v1927
    %v1974 = vpop.f32.mrf.mxu0
    %v1975 = vadd.f32 0.0, %v1974
    %v1976 = vpop.f32.mrf.mxu0
    %v1977 = vpop.f32.mrf.mxu0
    %v1978 = vadd.f32 0.0, %v1977
    %v1979 = vpop.f32.mrf.mxu0
    %1980 = vmatprep.mubr.bf16.mxu0 0
    %1981 = vmatmul.mubr.bf16.gmra.mxu0 %v1930
    %v1982 = vpop.f32.mrf.mxu0
    %v1983 = vadd.f32 0.0, %v1982
    %v1984 = vpop.f32.mrf.mxu0
    %v1985 = vpop.f32.mrf.mxu0
    %v1986 = vadd.f32 0.0, %v1985
    %v1987 = vpop.f32.mrf.mxu0
    %1988 = vdwg.mxu0
    %v1989 = vadd.f32 %v1896, %v1967
    %v1990 = vadd.f32 %v1897, %v1970
    %v1991 = vadd.f32 %v1898, %v1975
    %v1992 = vadd.f32 %v1899, %v1978
    %v1993 = vadd.f32 %v1900, %v1983
    %v1994 = vadd.f32 %v1901, %v1986
    %v1995 = vrot.slane %v1694, 1
    %v1996 = vrot.slane %v1696, 1
    %v1997 = vrot.slane %v1698, 1
    %v1998 = vrot.slane %v1700, 1
    %v1999 = vrot.slane %v1702, 1
    %v2000 = vrot.slane %v1704, 1
    %v2001 = vsel %vm295, %v1999, %v2000
    %v2002 = vsel %vm295, %v1998, %v1999
    %v2003 = vsel %vm295, %v1997, %v1998
    %v2004 = vsel %vm295, %v1996, %v1997
    %v2005 = vsel %vm295, %v1995, %v1996
    %v2006 = vsel %vm295, %v2000, %v1995
    %v2007 = vpack.c.bf16 %v2004, %v2005
    %v2008 = vpack.c.bf16 %v2002, %v2003
    %v2009 = vpack.c.bf16 %v2006, %v2001
    %s2010 = scalar_lea.vmem %s5, 24
    %v2011 = vld [vmem:[%s2010] sm:$0xf]
    %v2012 = vld [vmem:[%s2010 + $0x4] sm:$0xf]
    %v2015 = vunpack.c.l.b16 %v2011
    %v2016 = vunpack.c.l.b16 %v2012
    %v2017 = vpack.c.b16 %v2016, %v2015
    %v2020 = vsel %vm38, %v2007, 0
    %v2023 = vsel %vm38, %v2008, 0
    %v2026 = vsel %vm38, %v2009, 0
    %2028 = vmatprep.subr.bf16.mxu0 0
    %2029 = vmatpush1.bf16.msra.mxu0 0
    %2030 = vmatprep.subr.bf16.mxu0 0
    %2031 = vmatpush1.bf16.msra.mxu0 0
    %2032 = vmatprep.subr.bf16.mxu0 0
    %2033 = vmatpush1.bf16.msra.mxu0 0
    %2034 = vmatprep.subr.bf16.mxu0 0
    %2035 = vmatpush1.bf16.msra.mxu0 0
    %2036 = vmatprep.subr.bf16.mxu0 0
    %2037 = vmatpush1.bf16.msra.mxu0 0
    %2038 = vmatprep.subr.bf16.mxu0 0
    %2039 = vmatpush1.bf16.msra.mxu0 0
    %2040 = vmatprep.subr.bf16.mxu0 0
    %2041 = vmatpush1.bf16.msra.mxu0 0
    %2042 = vmatprep.subr.bf16.mxu0 0
    %2043 = vmatpush1.bf16.msra.mxu0 %v2017
    %2044 = vmatprep.subr.bf16.mxu0 0
    %2045 = vmatpush2.bf16.msra.mxu0 0
    %2046 = vmatprep.subr.bf16.mxu0 0
    %2047 = vmatpush2.bf16.msra.mxu0 0
    %2048 = vmatprep.subr.bf16.mxu0 0
    %2049 = vmatpush2.bf16.msra.mxu0 0
    %2050 = vmatprep.subr.bf16.mxu0 0
    %2051 = vmatpush2.bf16.msra.mxu0 0
    %2052 = vmatprep.subr.bf16.mxu0 0
    %2053 = vmatpush2.bf16.msra.mxu0 0
    %2054 = vmatprep.subr.bf16.mxu0 0
    %2055 = vmatpush2.bf16.msra.mxu0 0
    %2056 = vmatprep.subr.bf16.mxu0 0
    %2057 = vmatpush2.bf16.msra.mxu0 0
    %2058 = vmatprep.subr.bf16.mxu0 0
    %2059 = vmatpush2.bf16.msra.mxu0 0
    %2060 = vmatprep.mubr.bf16.mxu0 0
    %2061 = vmatmul.mubr.bf16.gmra.mxu0 %v2020
    %v2062 = vpop.f32.mrf.mxu0
    %v2063 = vadd.f32 0.0, %v2062
    %v2064 = vpop.f32.mrf.mxu0
    %v2065 = vpop.f32.mrf.mxu0
    %v2066 = vadd.f32 0.0, %v2065
    %v2067 = vpop.f32.mrf.mxu0
    %2068 = vmatprep.mubr.bf16.mxu0 0
    %2069 = vmatmul.mubr.bf16.gmra.mxu0 %v2023
    %v2070 = vpop.f32.mrf.mxu0
    %v2071 = vadd.f32 0.0, %v2070
    %v2072 = vpop.f32.mrf.mxu0
    %v2073 = vpop.f32.mrf.mxu0
    %v2074 = vadd.f32 0.0, %v2073
    %v2075 = vpop.f32.mrf.mxu0
    %2076 = vmatprep.mubr.bf16.mxu0 0
    %2077 = vmatmul.mubr.bf16.gmra.mxu0 %v2026
    %v2078 = vpop.f32.mrf.mxu0
    %v2079 = vadd.f32 0.0, %v2078
    %v2080 = vpop.f32.mrf.mxu0
    %v2081 = vpop.f32.mrf.mxu0
    %v2082 = vadd.f32 0.0, %v2081
    %v2083 = vpop.f32.mrf.mxu0
    %2084 = vdwg.mxu0
    %v2085 = vadd.f32 %v1989, %v2063
    %v2086 = vadd.f32 %v1990, %v2066
    %v2087 = vadd.f32 %v1991, %v2071
    %v2088 = vadd.f32 %v1992, %v2074
    %v2089 = vadd.f32 %v1993, %v2079
    %v2090 = vadd.f32 %v1994, %v2082
    %v2091 = vrot.slane %v1694, 2
    %v2092 = vrot.slane %v1696, 2
    %v2093 = vrot.slane %v1698, 2
    %v2094 = vrot.slane %v1700, 2
    %v2095 = vrot.slane %v1702, 2
    %v2096 = vrot.slane %v1704, 2
    %v2097 = vsel %vm990, %v2095, %v2096
    %v2098 = vsel %vm990, %v2094, %v2095
    %v2099 = vsel %vm990, %v2093, %v2094
    %v2100 = vsel %vm990, %v2092, %v2093
    %v2101 = vsel %vm990, %v2091, %v2092
    %v2102 = vsel %vm990, %v2096, %v2091
    %v2103 = vpack.c.bf16 %v2100, %v2101
    %v2104 = vpack.c.bf16 %v2098, %v2099
    %v2105 = vpack.c.bf16 %v2102, %v2097
    %s2106 = scalar_lea.vmem %s5, 32
    %v2107 = vld [vmem:[%s2106] sm:$0xf]
    %v2108 = vld [vmem:[%s2106 + $0x4] sm:$0xf]
    %v2111 = vunpack.c.l.b16 %v2107
    %v2112 = vunpack.c.l.b16 %v2108
    %v2113 = vpack.c.b16 %v2112, %v2111
    %v2116 = vsel %vm38, %v2103, 0
    %v2119 = vsel %vm38, %v2104, 0
    %v2122 = vsel %vm38, %v2105, 0
    %2124 = vmatprep.subr.bf16.mxu0 0
    %2125 = vmatpush1.bf16.msra.mxu0 0
    %2126 = vmatprep.subr.bf16.mxu0 0
    %2127 = vmatpush1.bf16.msra.mxu0 0
    %2128 = vmatprep.subr.bf16.mxu0 0
    %2129 = vmatpush1.bf16.msra.mxu0 0
    %2130 = vmatprep.subr.bf16.mxu0 0
    %2131 = vmatpush1.bf16.msra.mxu0 0
    %2132 = vmatprep.subr.bf16.mxu0 0
    %2133 = vmatpush1.bf16.msra.mxu0 0
    %2134 = vmatprep.subr.bf16.mxu0 0
    %2135 = vmatpush1.bf16.msra.mxu0 0
    %2136 = vmatprep.subr.bf16.mxu0 0
    %2137 = vmatpush1.bf16.msra.mxu0 0
    %2138 = vmatprep.subr.bf16.mxu0 0
    %2139 = vmatpush1.bf16.msra.mxu0 %v2113
    %2140 = vmatprep.subr.bf16.mxu0 0
    %2141 = vmatpush2.bf16.msra.mxu0 0
    %2142 = vmatprep.subr.bf16.mxu0 0
    %2143 = vmatpush2.bf16.msra.mxu0 0
    %2144 = vmatprep.subr.bf16.mxu0 0
    %2145 = vmatpush2.bf16.msra.mxu0 0
    %2146 = vmatprep.subr.bf16.mxu0 0
    %2147 = vmatpush2.bf16.msra.mxu0 0
    %2148 = vmatprep.subr.bf16.mxu0 0
    %2149 = vmatpush2.bf16.msra.mxu0 0
    %2150 = vmatprep.subr.bf16.mxu0 0
    %2151 = vmatpush2.bf16.msra.mxu0 0
    %2152 = vmatprep.subr.bf16.mxu0 0
    %2153 = vmatpush2.bf16.msra.mxu0 0
    %2154 = vmatprep.subr.bf16.mxu0 0
    %2155 = vmatpush2.bf16.msra.mxu0 0
    %2156 = vmatprep.mubr.bf16.mxu0 0
    %2157 = vmatmul.mubr.bf16.gmra.mxu0 %v2116
    %v2158 = vpop.f32.mrf.mxu0
    %v2159 = vadd.f32 0.0, %v2158
    %v2160 = vpop.f32.mrf.mxu0
    %v2161 = vpop.f32.mrf.mxu0
    %v2162 = vadd.f32 0.0, %v2161
    %v2163 = vpop.f32.mrf.mxu0
    %2164 = vmatprep.mubr.bf16.mxu0 0
    %2165 = vmatmul.mubr.bf16.gmra.mxu0 %v2119
    %v2166 = vpop.f32.mrf.mxu0
    %v2167 = vadd.f32 0.0, %v2166
    %v2168 = vpop.f32.mrf.mxu0
    %v2169 = vpop.f32.mrf.mxu0
    %v2170 = vadd.f32 0.0, %v2169
    %v2171 = vpop.f32.mrf.mxu0
    %2172 = vmatprep.mubr.bf16.mxu0 0
    %2173 = vmatmul.mubr.bf16.gmra.mxu0 %v2122
    %v2174 = vpop.f32.mrf.mxu0
    %v2175 = vadd.f32 0.0, %v2174
    %v2176 = vpop.f32.mrf.mxu0
    %v2177 = vpop.f32.mrf.mxu0
    %v2178 = vadd.f32 0.0, %v2177
    %v2179 = vpop.f32.mrf.mxu0
    %2180 = vdwg.mxu0
    %v2181 = vadd.f32 %v2085, %v2159
    %v2182 = vadd.f32 %v2086, %v2162
    %v2183 = vadd.f32 %v2087, %v2167
    %v2184 = vadd.f32 %v2088, %v2170
    %v2185 = vadd.f32 %v2089, %v2175
    %v2186 = vadd.f32 %v2090, %v2178
    %v2187 = vmul.f32 %v1519, %v95
    %v2188 = vmul.f32 %v1520, %v95
    %v2189 = vmul.f32 %v1521, %v95
    %v2190 = vmul.f32 %v1522, %v95
    %v2191 = vmul.f32 %v1523, %v95
    %v2192 = vmul.f32 %v1524, %v95
    %v2193 = vadd.f32 %v2187, %v2181
    %v2194 = vadd.f32 %v2188, %v2182
    %v2195 = vadd.f32 %v2189, %v2183
    %v2196 = vadd.f32 %v2190, %v2184
    %v2197 = vadd.f32 %v2191, %v2185
    %v2198 = vadd.f32 %v2192, %v2186
    %v2199 = vmul.f32 %v2193, %v389
    %v2200 = vmul.f32 %v2194, %v394
    %v2201 = vmul.f32 %v2195, %v399
    %v2202 = vmul.f32 %v2196, %v404
    %v2203 = vmul.f32 %v2197, %v409
    %v2204 = vmul.f32 %v2198, %v414
    %v2205 = vmul.f32 %v2199, %v2199
    %v2206 = vmul.f32 %v2200, %v2200
    %v2207 = vmul.f32 %v2201, %v2201
    %v2208 = vmul.f32 %v2202, %v2202
    %v2209 = vmul.f32 %v2203, %v2203
    %v2210 = vmul.f32 %v2204, %v2204
    %2217 = vrot.lane.b32.xlu0 %v2205, 32
    %v2218 = vpop.permute.xlu0 %2217
    %2219 = vrot.lane.b32.xlu0 %v2206, 32
    %v2220 = vpop.permute.xlu0 %2219
    %2221 = vrot.lane.b32.xlu0 %v2207, 32
    %v2222 = vpop.permute.xlu0 %2221
    %2223 = vrot.lane.b32.xlu0 %v2208, 32
    %v2224 = vpop.permute.xlu0 %2223
    %2225 = vrot.lane.b32.xlu0 %v2209, 32
    %v2226 = vpop.permute.xlu0 %2225
    %2227 = vrot.lane.b32.xlu0 %v2210, 32
    %v2228 = vpop.permute.xlu0 %2227
    %v2235 = vsel %vm482, %v2199, %v2218
    %v2236 = vsel %vm482, %v2200, %v2220
    %v2237 = vsel %vm482, %v2201, %v2222
    %v2238 = vsel %vm482, %v2202, %v2224
    %v2239 = vsel %vm482, %v2203, %v2226
    %v2240 = vsel %vm482, %v2204, %v2228
    %v2241 = vsel %vm1135, %v2235, 0.0
    %v2242 = vsel %vm1135, %v2236, 0.0
    %v2243 = vadd.f32 %v2241, %v2242
    %v2244 = vsel %vm1135, %v2237, 0.0
    %v2245 = vadd.f32 %v2243, %v2244
    %v2246 = vsel %vm1135, %v2238, 0.0
    %v2247 = vadd.f32 %v2245, %v2246
    %v2248 = vsel %vm1135, %v2239, 0.0
    %v2249 = vadd.f32 %v2247, %v2248
    %v2250 = vsel %vm1135, %v2240, 0.0
    %v2251 = vadd.f32 %v2249, %v2250
    %v2252 = vrot.slane %v2251, 4
    %v2253 = vadd.f32 %v2251, %v2252
    %v2254 = vrot.slane %v2253, 2
    %v2255 = vadd.f32 %v2253, %v2254
    %v2256 = vrot.slane %v2255, 1
    %v2257 = vadd.f32 %v2255, %v2256
    %v2258 = vmul.f32 %v2257, 0.03125
    %v2259 = vmul.f32 %v2258, %v2258
    %2261 = vrot.lane.b32.xlu0 %v2259, 32
    %v2262 = vpop.permute.xlu0 %2261
    %v2264 = vsub.f32 %v2258, %v2262
    %v2265 = vmax.f32 %v2264, 0.0
    %v2266 = vadd.f32 %v2265, 1e-05
    %v2267 = vrsqrt.pop %v2266
    %v2268 = vsub.f32 %v2199, %v2258
    %v2269 = vsub.f32 %v2200, %v2258
    %v2270 = vsub.f32 %v2201, %v2258
    %v2271 = vsub.f32 %v2202, %v2258
    %v2272 = vsub.f32 %v2203, %v2258
    %v2273 = vsub.f32 %v2204, %v2258
    %v2274 = vlaneseq
    %v2275 = vshrl.u32 %v2274, 7
    %v2276 = vsub.s32 0, %v2275
    %v2277 = vrot.slane %v2267, %v2276
    %2279 = vrot.lane.b32.xlu0 %v2277, 96
    %v2280 = vpop.permute.xlu0 %2279
    %v2282 = vmul.f32 %v2268, %v2280
    %v2283 = vmul.f32 %v2269, %v2280
    %v2284 = vmul.f32 %v2270, %v2280
    %v2285 = vmul.f32 %v2271, %v2280
    %v2286 = vmul.f32 %v2272, %v2280
    %v2287 = vmul.f32 %v2273, %v2280
    %v2288 = vlaneseq
    %v2289 = vshrl.u32 %v2288, 7
    %v2290 = vsub.s32 0, %v2289
    %v2291 = vrot.slane %v1219, %v2290
    %v2292 = vmul.f32 %v2282, %v2291
    %v2293 = vmul.f32 %v2283, %v2291
    %v2294 = vmul.f32 %v2284, %v2291
    %v2295 = vmul.f32 %v2285, %v2291
    %v2296 = vmul.f32 %v2286, %v2291
    %v2297 = vmul.f32 %v2287, %v2291
    %v2298 = vlaneseq
    %v2299 = vshrl.u32 %v2298, 7
    %v2300 = vsub.s32 0, %v2299
    %v2301 = vrot.slane %v1220, %v2300
    %v2302 = vadd.f32 %v2292, %v2301
    %v2303 = vadd.f32 %v2293, %v2301
    %v2304 = vadd.f32 %v2294, %v2301
    %v2305 = vadd.f32 %v2295, %v2301
    %v2306 = vadd.f32 %v2296, %v2301
    %v2307 = vadd.f32 %v2297, %v2301
    %v2308 = vmax.f32 %v2302, 0.0
    %v2309 = vmax.f32 %v2303, 0.0
    %v2310 = vmax.f32 %v2304, 0.0
    %v2311 = vmax.f32 %v2305, 0.0
    %v2312 = vmax.f32 %v2306, 0.0
    %v2313 = vmax.f32 %v2307, 0.0
    %v2314 = vmul.f32 %v2308, %v389
    %v2315 = vmul.f32 %v2309, %v394
    %v2316 = vmul.f32 %v2310, %v399
    %v2317 = vmul.f32 %v2311, %v404
    %v2318 = vmul.f32 %v2312, %v409
    %v2319 = vmul.f32 %v2313, %v414
    %v2320 = vsel %vm482, %v2314, -inf
    %v2321 = vsel %vm482, %v2315, -inf
    %v2322 = vsel %vm482, %v2316, -inf
    %v2323 = vmax.f32 %v2320, %v2322
    %v2324 = vmax.f32 %v2323, %v2321
    %v2325 = vrot.slane %v2324, 4
    %v2326 = vmax.f32 %v2324, %v2325
    %v2327 = vrot.slane %v2326, 2
    %v2328 = vmax.f32 %v2326, %v2327
    %v2329 = vrot.slane %v2328, 1
    %v2330 = vmax.f32 %v2328, %v2329
    %v2331 = vsel %vm482, %v2317, -inf
    %v2332 = vsel %vm482, %v2318, -inf
    %v2333 = vsel %vm482, %v2319, -inf
    %v2334 = vmax.f32 %v2331, %v2333
    %v2335 = vmax.f32 %v2334, %v2332
    %v2336 = vrot.slane %v2335, 4
    %v2337 = vmax.f32 %v2335, %v2336
    %v2338 = vrot.slane %v2337, 2
    %v2339 = vmax.f32 %v2337, %v2338
    %v2340 = vrot.slane %v2339, 1
    %v2341 = vmax.f32 %v2339, %v2340
    %v2342 = vpack.c.bf16 %v2330, %v2330
    %v2343 = vpack.c.bf16 %v2341, %v2341
    %v2344 = vld [vmem:[%s6] sm:$0xf]
    %v2345 = vld [vmem:[%s6 + $0x4] sm:$0xf]
    %v2346 = vld [vmem:[%s6 + $0x8] sm:$0xf]
    %v2347 = vld [vmem:[%s6 + $0xc] sm:$0xf]
    %v2348 = vld [vmem:[%s8 + $0xc] sm:$0x1]
    %v2349 = vlaneseq
    %v2350 = vshrl.u32 %v2349, 7
    %v2351 = vsub.s32 0, %v2350
    %v2352 = vrot.slane %v2348, %v2351
    %v2355 = vunpack.c.l.b16 %v2342
    %v2356 = vunpack.c.l.b16 %v2343
    %vm2357 = vcmask 1041409
    %v2358 = vsel %vm2357, %v2356, %v2355
    %v2359 = vpack.c.b16 %v2358, %v2358
    %v2364 = vunpack.c.l.b16 %v2344
    %v2365 = vunpack.c.l.b16 %v2345
    %v2366 = vunpack.c.l.b16 %v2346
    %v2367 = vunpack.c.l.b16 %v2347
    %v2368 = vpack.c.b16 %v2365, %v2364
    %v2369 = vpack.c.b16 %v2367, %v2366
    %v2373 = vsel %vm482, %v2359, 0
    %2375 = vmatprep.subr.bf16.mxu0 0
    %2376 = vmatpush1.bf16.msra.mxu0 0
    %2377 = vmatprep.subr.bf16.mxu0 0
    %2378 = vmatpush1.bf16.msra.mxu0 0
    %2379 = vmatprep.subr.bf16.mxu0 0
    %2380 = vmatpush1.bf16.msra.mxu0 0
    %2381 = vmatprep.subr.bf16.mxu0 0
    %2382 = vmatpush1.bf16.msra.mxu0 0
    %2383 = vmatprep.subr.bf16.mxu0 0
    %2384 = vmatpush1.bf16.msra.mxu0 0
    %2385 = vmatprep.subr.bf16.mxu0 0
    %2386 = vmatpush1.bf16.msra.mxu0 0
    %2387 = vmatprep.subr.bf16.mxu0 0
    %2388 = vmatpush1.bf16.msra.mxu0 %v2369
    %2389 = vmatprep.subr.bf16.mxu0 0
    %2390 = vmatpush1.bf16.msra.mxu0 %v2368
    %2391 = vmatprep.subr.bf16.mxu0 0
    %2392 = vmatpush2.bf16.msra.mxu0 0
    %2393 = vmatprep.subr.bf16.mxu0 0
    %2394 = vmatpush2.bf16.msra.mxu0 0
    %2395 = vmatprep.subr.bf16.mxu0 0
    %2396 = vmatpush2.bf16.msra.mxu0 0
    %2397 = vmatprep.subr.bf16.mxu0 0
    %2398 = vmatpush2.bf16.msra.mxu0 0
    %2399 = vmatprep.subr.bf16.mxu0 0
    %2400 = vmatpush2.bf16.msra.mxu0 0
    %2401 = vmatprep.subr.bf16.mxu0 0
    %2402 = vmatpush2.bf16.msra.mxu0 0
    %2403 = vmatprep.subr.bf16.mxu0 0
    %2404 = vmatpush2.bf16.msra.mxu0 0
    %2405 = vmatprep.subr.bf16.mxu0 0
    %2406 = vmatpush2.bf16.msra.mxu0 0
    %2407 = vmatprep.mubr.bf16.mxu0 0
    %2408 = vmatmul.mubr.bf16.gmra.mxu0 %v2373
    %v2409 = vpop.f32.mrf.mxu0
    %v2410 = vadd.f32 %v2352, %v2409
    %v2411 = vpop.f32.mrf.mxu0
    %v2412 = vpop.f32.mrf.mxu0
    %v2413 = vpop.f32.mrf.mxu0
    %2414 = vdwg.mxu0
    %vm2415 = vcmask 254976
    %v2416 = vsel %vm2415, %v2410, 0.0
    %v2417 = vrot.slane %v2416, 4
    %v2418 = vadd.f32 %v2416, %v2417
    %v2419 = vrot.slane %v2418, 2
    %v2420 = vadd.f32 %v2418, %v2419
    %v2421 = vrot.slane %v2420, 1
    %v2422 = vadd.f32 %v2420, %v2421
    %v2423 = vrcp.pop 2.0
    %v2424 = vmul.f32 %v2422, %v2423
    %v2425 = vmul.f32 %v2410, %v2410
    %v2426 = vsel %vm2415, %v2425, 0.0
    %v2427 = vrot.slane %v2426, 4
    %v2428 = vadd.f32 %v2426, %v2427
    %v2429 = vrot.slane %v2428, 2
    %v2430 = vadd.f32 %v2428, %v2429
    %v2431 = vrot.slane %v2430, 1
    %v2432 = vadd.f32 %v2430, %v2431
    %v2433 = vmul.f32 %v2432, %v2423
    %v2434 = vmul.f32 %v2424, %v2424
    %v2435 = vsub.f32 %v2433, %v2434
    %v2436 = vmax.f32 %v2435, 0.0
    %v2437 = vadd.f32 %v2436, 1e-05
    %v2438 = vrsqrt.pop %v2437
    %v2439 = vsub.f32 %v2410, %v2424
    %v2440 = vmul.f32 %v2439, %v2438
    %v2441 = vld [vmem:[%s8 + $0xd] sm:$0x1]
    %v2442 = vlaneseq
    %v2443 = vshrl.u32 %v2442, 7
    %v2444 = vsub.s32 0, %v2443
    %v2445 = vrot.slane %v2441, %v2444
    %v2446 = vmul.f32 %v2440, %v2445
    %v2447 = vld [vmem:[%s8 + $0xe] sm:$0x1]
    %v2448 = vlaneseq
    %v2449 = vshrl.u32 %v2448, 7
    %v2450 = vsub.s32 0, %v2449
    %v2451 = vrot.slane %v2447, %v2450
    %v2452 = vadd.f32 %v2446, %v2451
    %v2453 = vmax.f32 %v2452, 0.0
    %v2454 = vpack.c.bf16 %v2453, %v2453
    %v2455 = vld [vmem:[%s7] sm:$0xf]
    %v2456 = vld [vmem:[%s7 + $0x4] sm:$0xf]
    %v2457 = vld [vmem:[%s7 + $0x8] sm:$0xf]
    %v2458 = vld [vmem:[%s7 + $0xc] sm:$0xf]
    %v2459 = vld [vmem:[%s8 + $0xf] sm:$0x1]
    %v2460 = vlaneseq
    %v2461 = vshrl.u32 %v2460, 7
    %v2462 = vsub.s32 0, %v2461
    %v2463 = vrot.slane %v2459, %v2462
    %v2468 = vunpack.c.l.b16 %v2455
    %v2469 = vunpack.c.l.b16 %v2456
    %v2470 = vunpack.c.l.b16 %v2457
    %v2471 = vunpack.c.l.b16 %v2458
    %v2472 = vpack.c.b16 %v2469, %v2468
    %v2473 = vpack.c.b16 %v2471, %v2470
    %v2477 = vsel %vm482, %v2454, 0
    %2479 = vmatprep.subr.bf16.mxu0 0
    %2480 = vmatpush1.bf16.msra.mxu0 0
    %2481 = vmatprep.subr.bf16.mxu0 0
    %2482 = vmatpush1.bf16.msra.mxu0 0
    %2483 = vmatprep.subr.bf16.mxu0 0
    %2484 = vmatpush1.bf16.msra.mxu0 0
    %2485 = vmatprep.subr.bf16.mxu0 0
    %2486 = vmatpush1.bf16.msra.mxu0 0
    %2487 = vmatprep.subr.bf16.mxu0 0
    %2488 = vmatpush1.bf16.msra.mxu0 0
    %2489 = vmatprep.subr.bf16.mxu0 0
    %2490 = vmatpush1.bf16.msra.mxu0 0
    %2491 = vmatprep.subr.bf16.mxu0 0
    %2492 = vmatpush1.bf16.msra.mxu0 %v2473
    %2493 = vmatprep.subr.bf16.mxu0 0
    %2494 = vmatpush1.bf16.msra.mxu0 %v2472
    %2495 = vmatprep.subr.bf16.mxu0 0
    %2496 = vmatpush2.bf16.msra.mxu0 0
    %2497 = vmatprep.subr.bf16.mxu0 0
    %2498 = vmatpush2.bf16.msra.mxu0 0
    %2499 = vmatprep.subr.bf16.mxu0 0
    %2500 = vmatpush2.bf16.msra.mxu0 0
    %2501 = vmatprep.subr.bf16.mxu0 0
    %2502 = vmatpush2.bf16.msra.mxu0 0
    %2503 = vmatprep.subr.bf16.mxu0 0
    %2504 = vmatpush2.bf16.msra.mxu0 0
    %2505 = vmatprep.subr.bf16.mxu0 0
    %2506 = vmatpush2.bf16.msra.mxu0 0
    %2507 = vmatprep.subr.bf16.mxu0 0
    %2508 = vmatpush2.bf16.msra.mxu0 0
    %2509 = vmatprep.subr.bf16.mxu0 0
    %2510 = vmatpush2.bf16.msra.mxu0 0
    %2511 = vmatprep.mubr.bf16.mxu0 0
    %2512 = vmatmul.mubr.bf16.gmra.mxu0 %v2477
    %v2513 = vpop.f32.mrf.mxu0
    %v2514 = vadd.f32 %v2463, %v2513
    %v2515 = vpop.f32.mrf.mxu0
    %v2516 = vpop.f32.mrf.mxu0
    %v2517 = vpop.f32.mrf.mxu0
    %2518 = vdwg.mxu0
    %vm2519 = vcmask 25600
    %2520 = vst.msk [vmem:[#allocation6] sm:$0x3] %vm2519, %v2514
    // Predicated region
    $region48: #{textcnn_forward.1} parent=1 // pred_check
      _
    $region49: #{textcnn_forward.1} parent=1 // pred_check_branch
      %2522 = sbr.rel (0) target = $region51
    $region50: #{textcnn_forward.1} parent=1 // pred_region
      %s2524 = ssub.s32 32, 32
      %2525 = vsyncadd [#allocation7], %s2524
      %s2527 = sshll.u32 [#allocation6], 4
      %s2528 = int_to_ptr.vmem [resolvable:$true] %s2527
      %2530 = dma.vmem_to_hbm [thread:$0]  %s2528, 32, %s9, [#allocation7]
    $region51: #{textcnn_forward.1} parent=1 // pred_fallthru
      _
    // Predicated region
    $region52: #{textcnn_forward.1} parent=1 // pred_check
      _
    $region53: #{textcnn_forward.1} parent=1 // pred_check_branch
      %2532 = sbr.rel (0) target = $region55
    $region54: #{textcnn_forward.1} parent=1 // pred_region
      %2533 = dma.done [#allocation7], 32
    $region55: #{textcnn_forward.1} parent=1 // pred_fallthru
      _
    %2534 = vsyncpa [#allocation7], 1

</llo_original>
